<compile_context>
chip_gen: v7x
topology: tpu7x:2x2x1
jax: 0.10.0
libtpu: 0.0.40
codegen_flags: <defaults>
</compile_context>

<pallas_src>
import functools

import jax
import jax.numpy as jnp
import numpy as np
from jax import lax
from jax.experimental import pallas as pl
from jax.experimental.pallas import tpu as pltpu

LN_EPS = 1e-5        # PyTorch nn.LayerNorm default
OUT_PAD = 128        # lane-dense padded output width


# ---------------------------------------------------------------------------
# Kernel helpers
# ---------------------------------------------------------------------------
def _mxdot(a, w):
    """MXU matmul: bf16 operands, f32 accumulation."""
    return jnp.dot(a.astype(jnp.bfloat16), w.astype(jnp.bfloat16),
                   preferred_element_type=jnp.float32)


def _layernorm(h, gamma, beta):
    """One-pass LayerNorm; var clamped at 0 (E[h^2]-mu^2 cancellation safety)."""
    mu = jnp.mean(h, axis=-1, keepdims=True)
    var = jnp.maximum(jnp.mean(h * h, axis=-1, keepdims=True) - mu * mu, 0.0)
    return (h - mu) * lax.rsqrt(var + LN_EPS) * gamma + beta


# ---------------------------------------------------------------------------
# Kernel
# ---------------------------------------------------------------------------
def _epd_kernel(num_steps, tile_m, n_pad, a_resident,
                x_ref, a_ref,
                ew1_ref, eb1_ref, ew2_ref, eb2_ref, eg_ref, ebt_ref,
                pw1h_ref, pw1a_ref, pw2_ref, pb1_ref, pb2_ref, pg_ref, pbt_ref,
                dw1_ref, db1_ref, dw2_ref, db2_ref,
                out_ref,
                h_ref, hb_ref):
    phase = pl.program_id(0)      # 0: encoder, 1..S: processor steps, S+1: decoder
    tile = pl.program_id(1)       # node-row tile
    row0 = pl.multiple_of(tile * tile_m, tile_m)

    # ---- phase 0: Encoder --> latent state, slot 0 (f32 + bf16 copy) ---------
    @pl.when(phase == 0)
    def _encode():
        t = jnp.maximum(_mxdot(x_ref[...], ew1_ref[...]) + eb1_ref[...], 0.0)
        t = _mxdot(t, ew2_ref[...]) + eb2_ref[...]
        h0 = _layernorm(t, eg_ref[...], ebt_ref[...])
        h_ref[pl.ds(row0, tile_m), :] = h0
        hb_ref[pl.ds(row0, tile_m), :] = h0.astype(jnp.bfloat16)
        # Never let an unwritten output VMEM block reach HBM.
        out_ref[...] = jnp.zeros_like(out_ref)

    # ---- phases 1..S: message passing + residual (ping-pong slots) ----------
    @pl.when(jnp.logical_and(phase >= 1, phase <= num_steps))
    def _process():
        src_base = ((phase - 1) % 2) * n_pad
        dst_base = (phase % 2) * n_pad
        # full previous-step latent state, already bf16 (cast once per step)
        h_all = hb_ref[pl.ds(pl.multiple_of(src_base, n_pad), n_pad), :]
        # f32 tile for the residual / high-precision update
        h_tile = h_ref[pl.ds(pl.multiple_of(src_base + row0, tile_m), tile_m), :]
        if a_resident:
            a_blk = a_ref[pl.ds(row0, tile_m), :]              # bf16, VMEM-resident
        else:
            a_blk = a_ref[...].astype(jnp.float32).astype(jnp.bfloat16)  # int8 stream
        # scatter-sum aggregation as dense matmul over this tile's receiver rows
        agg = jnp.dot(a_blk, h_all, preferred_element_type=jnp.float32)
        # concat([h, agg]) @ W1  ==  h @ W1[:H] + agg @ W1[H:]  (no lane concat)
        t = _mxdot(h_tile, pw1h_ref[0]) + _mxdot(agg, pw1a_ref[0]) + pb1_ref[0]
        t = jnp.maximum(t, 0.0)
        t = _mxdot(t, pw2_ref[0]) + pb2_ref[0]
        t = _layernorm(t, pg_ref[0], pbt_ref[0])
        h_new = h_tile + t                                     # residual (f32)
        dst = pl.multiple_of(dst_base + row0, tile_m)
        h_ref[pl.ds(dst, tile_m), :] = h_new
        hb_ref[pl.ds(dst, tile_m), :] = h_new.astype(jnp.bfloat16)

    # ---- last phase: Decoder --> lane-dense padded output --------------------
    @pl.when(phase == num_steps + 1)
    def _decode():
        src_base = (num_steps % 2) * n_pad                     # static
        h_tile = h_ref[pl.ds(pl.multiple_of(src_base + row0, tile_m), tile_m), :]
        d = jnp.maximum(_mxdot(h_tile, dw1_ref[...]) + db1_ref[...], 0.0)
        out_ref[...] = _mxdot(d, dw2_ref[...]) + db2_ref[...]


# ---------------------------------------------------------------------------
# Planning helpers
# ---------------------------------------------------------------------------
def _ceil_div(a, b):
    return -(-a // b)


def _vmem_budget_bytes():
    cap = 128 * 1024 * 1024
    try:
        cap = int(getattr(pltpu.get_tpu_info(), "vmem_capacity_bytes", cap))
    except Exception:
        pass
    # ~96-100 MiB on 128-MiB parts (v5e/v6e), ~48 MiB on 64-MiB parts (v7x).
    return int(min(100 * (1 << 20), cap * 3 // 4))


def _plan(n, din, hidden, tile_m_req, a_resident_override):
    assert tile_m_req >= 32 and tile_m_req % 32 == 0, "tile_m must be a multiple of 32"
    budget = _vmem_budget_bytes()
    lane = lambda d: 128 * _ceil_div(d, 128)
    gran = 32                                    # keeps every bf16/int8 sublane slice aligned
    n_gran = gran * _ceil_div(n, gran)
    tile_m = n_gran if n_gran <= tile_m_req else tile_m_req

    def fixed_bytes(tm, npad):
        b = 2 * npad * lane(hidden) * (4 + 2)    # f32 + bf16 ping-pong latent scratch
        b += 2 * tm * lane(din) * 4              # x blocks (double-buffered)
        b += 2 * tm * OUT_PAD * 4                # decoder output blocks
        b += 4 * (1 << 20)                       # weights + compiler headroom (lump)
        return b

    n_pad = tile_m * _ceil_div(n, tile_m)
    a_res_bytes = 2 * n_pad * n_pad * 2          # full bf16 A (assume double-buffered)
    if a_resident_override is None:
        a_res = fixed_bytes(tile_m, n_pad) + a_res_bytes <= budget
    else:
        a_res = bool(a_resident_override)
    if not a_res:
        # shrink the streamed-A tile until its triple-buffered int8 blocks fit
        while tile_m > 32 and fixed_bytes(tile_m, tile_m * _ceil_div(n, tile_m)) + \
                3 * tile_m * (tile_m * _ceil_div(n, tile_m)) > budget:
            tile_m //= 2
        tile_m = max(32, (tile_m // 32) * 32)
        n_pad = tile_m * _ceil_div(n, tile_m)
    num_tiles = n_pad // tile_m
    return tile_m, n_pad, num_tiles, a_res, budget


# ---------------------------------------------------------------------------
# Wrapper
# ---------------------------------------------------------------------------
def encoder_processor_decoder(x, A, params, num_steps, hidden_size, output_size,
                              *, tile_m=256, a_resident=None):
    """x: [N, Din] f32; A: [N, N] f32 dense adjacency counts (A[r, s] = #edges s->r);
    params: flat f32 list as produced by build_params."""
    assert num_steps >= 1
    n, din = x.shape
    H = hidden_size
    bf16, f32 = jnp.bfloat16, jnp.float32

    tile_m, n_pad, num_tiles, a_res, vmem_budget = _plan(n, din, H, tile_m, a_resident)
    num_phases = num_steps + 2
    last_phase = num_phases - 1

    # ---- pad node rows; adjacency: resident bf16 or streamed int8 ------------
    x_p = jnp.zeros((n_pad, din), f32).at[:n, :].set(x)
    if a_res:
        # counts <= 256 are exact in bf16
        a_p = jnp.zeros((n_pad, n_pad), f32).at[:n, :n].set(A).astype(bf16)
    else:
        # TODO(synk): int8 storage requires edge-multiplicity counts <= 127 (exact).
        a_p = jnp.zeros((n_pad, n_pad), f32).at[:n, :n].set(A).astype(jnp.int8)

    # ---- unpack / repack parameters ------------------------------------------
    it = iter(params)
    ew1 = next(it).astype(bf16); eb1 = next(it)
    ew2 = next(it).astype(bf16); eb2 = next(it)
    eg = next(it); ebt = next(it)
    pw1h, pw1a, pw2, pb1, pb2, pg, pbt = [], [], [], [], [], [], []
    for _ in range(num_steps):
        w1 = next(it); b1 = next(it); w2 = next(it); b2 = next(it)
        g = next(it); be = next(it)
        pw1h.append(w1[:H, :].astype(bf16))      # split-W1: "h" half
        pw1a.append(w1[H:, :].astype(bf16))      # split-W1: "agg" half
        pw2.append(w2.astype(bf16))
        pb1.append(b1); pb2.append(b2); pg.append(g); pbt.append(be)
    pw1h = jnp.stack(pw1h); pw1a = jnp.stack(pw1a); pw2 = jnp.stack(pw2)
    pb1 = jnp.stack(pb1); pb2 = jnp.stack(pb2)
    pg = jnp.stack(pg); pbt = jnp.stack(pbt)
    dw1 = next(it).astype(bf16); db1 = next(it)
    dw2 = next(it); db2 = next(it)
    # lane-dense decoder output: pad the tiny output dim up to 128 lanes
    dw2p = jnp.zeros((H, OUT_PAD), f32).at[:, :output_size].set(dw2).astype(bf16)
    db2p = jnp.zeros((1, OUT_PAD), f32).at[:, :output_size].set(db2)

    operands = (x_p, a_p, ew1, eb1, ew2, eb2, eg, ebt,
                pw1h, pw1a, pw2, pb1, pb2, pg, pbt,
                dw1, db1, dw2p, db2p)

    # ---- BlockSpecs -----------------------------------------------------------
    const2 = lambda p, i: (0, 0)
    # x is consumed only in phase 0; clamp to the last-used block afterwards
    x_map = lambda p, i: (jnp.where(p == 0, i, num_tiles - 1), 0)
    # stream exactly one processor step's weights per phase (clamped outside 1..S)
    step3 = lambda p, i: (jnp.clip(p - 1, 0, num_steps - 1), 0, 0)
    # output blocks only advance in the decoder phase
    out_map = lambda p, i: (jnp.where(p == last_phase, i, 0), 0)

    if a_res:
        # full adjacency VMEM-resident: constant block index => DMA'd exactly once
        a_spec = pl.BlockSpec((n_pad, n_pad), const2)
    else:
        def a_map(p, i):
            # consumed in phases 1..S; clamp to first/last-used block elsewhere
            return (jnp.where(p < 1, 0,
                              jnp.where(p > num_steps, num_tiles - 1, i)), 0)
        if num_tiles >= 3:
            try:
                a_spec = pl.BlockSpec((tile_m, n_pad), a_map,
                                      pipeline_mode=pl.Buffered(3))
            except Exception:
                a_spec = pl.BlockSpec((tile_m, n_pad), a_map)
        else:
            a_spec = pl.BlockSpec((tile_m, n_pad), a_map)

    in_specs = [
        pl.BlockSpec((tile_m, din), x_map),        # x rows
        a_spec,                                    # adjacency (resident or streamed)
        pl.BlockSpec((din, H), const2),            # encoder W1
        pl.BlockSpec((1, H), const2),              # encoder b1
        pl.BlockSpec((H, H), const2),              # encoder W2
        pl.BlockSpec((1, H), const2),              # encoder b2
        pl.BlockSpec((1, H), const2),              # encoder LN gamma
        pl.BlockSpec((1, H), const2),              # encoder LN beta
        pl.BlockSpec((1, H, H), step3),            # processor W1[:H]  (stacked)
        pl.BlockSpec((1, H, H), step3),            # processor W1[H:]  (stacked)
        pl.BlockSpec((1, H, H), step3),            # processor W2      (stacked)
        pl.BlockSpec((1, 1, H), step3),            # processor b1
        pl.BlockSpec((1, 1, H), step3),            # processor b2
        pl.BlockSpec((1, 1, H), step3),            # processor LN gamma
        pl.BlockSpec((1, 1, H), step3),            # processor LN beta
        pl.BlockSpec((H, H), const2),              # decoder W1
        pl.BlockSpec((1, H), const2),              # decoder b1
        pl.BlockSpec((H, OUT_PAD), const2),        # decoder W2 (lane-padded)
        pl.BlockSpec((1, OUT_PAD), const2),        # decoder b2 (lane-padded)
    ]
    out_specs = pl.BlockSpec((tile_m, OUT_PAD), out_map)
    out_shape = jax.ShapeDtypeStruct((n_pad, OUT_PAD), f32)

    # ---- advisory cost estimate ----------------------------------------------
    flops = 2 * n_pad * (din * H + H * H)                               # encoder
    flops += num_steps * (2 * n_pad * n_pad * H + 6 * n_pad * H * H)    # processors
    flops += 2 * n_pad * (H * H + H * OUT_PAD)                          # decoder
    bytes_accessed = sum(int(np.prod(o.shape)) * o.dtype.itemsize for o in operands)
    if not a_res:   # streamed A is re-read every processor step
        bytes_accessed += (num_steps - 1) * int(np.prod(a_p.shape)) * a_p.dtype.itemsize
    bytes_accessed += n_pad * OUT_PAD * 4
    cost = pl.CostEstimate(flops=int(flops),
                           transcendentals=int(n_pad * (1 + num_steps)),
                           bytes_accessed=int(bytes_accessed))

    out_padded = pl.pallas_call(
        functools.partial(_epd_kernel, num_steps, tile_m, n_pad, a_res),
        grid_spec=pltpu.PrefetchScalarGridSpec(
            num_scalar_prefetch=0,
            grid=(num_phases, num_tiles),
            in_specs=in_specs,
            out_specs=out_specs,
            scratch_shapes=[pltpu.VMEM((2 * n_pad, H), f32),     # ping-pong latent (f32)
                            pltpu.VMEM((2 * n_pad, H), bf16)],   # bf16 copy for MXU agg
        ),
        out_shape=out_shape,
        compiler_params=pltpu.CompilerParams(
            # The node-tile axis must stay sequential: every tile of phase p has to
            # land in the shared VMEM h scratch before phase p+1 aggregates over all
            # nodes, so it cannot be sharded across v7x's two TensorCores.
            # TODO(synk): CORE_PARALLEL + VMEM_SHARED/CMEM h exchange would enable a
            # ~2x speedup on v7x.
            dimension_semantics=("arbitrary", "arbitrary"),
            vmem_limit_bytes=int(vmem_budget),
        ),
        cost_estimate=cost,
    )(*operands)

    return out_padded[:n, :output_size]


# ---------------------------------------------------------------------------
# Parameter construction (deterministic, in-script)
# ---------------------------------------------------------------------------
def _linear_params(key, din, dout):
    kw, kb = jax.random.split(key)
    lim = 1.0 / np.sqrt(din)
    w = jax.random.uniform(kw, (din, dout), jnp.float32, -lim, lim)
    b = jax.random.uniform(kb, (1, dout), jnp.float32, -lim, lim)
    return w, b


def build_params(key, node_input_size, hidden_size, output_size, num_steps):
    keys = iter(jax.random.split(key, 2 * num_steps + 4))
    params = []
    # Encoder: Linear(Din, H), ReLU, Linear(H, H), LayerNorm(H)
    w1, b1 = _linear_params(next(keys), node_input_size, hidden_size)
    w2, b2 = _linear_params(next(keys), hidden_size, hidden_size)
    params += [w1, b1, w2, b2,
               jnp.ones((1, hidden_size), jnp.float32),
               jnp.zeros((1, hidden_size), jnp.float32)]
    # Processors (shared_mp=False -> independent weights per step)
    for _ in range(num_steps):
        w1, b1 = _linear_params(next(keys), 2 * hidden_size, hidden_size)
        w2, b2 = _linear_params(next(keys), hidden_size, hidden_size)
        params += [w1, b1, w2, b2,
                   jnp.ones((1, hidden_size), jnp.float32),
                   jnp.zeros((1, hidden_size), jnp.float32)]
    # Decoder: Linear(H, H), ReLU, Linear(H, out), no LayerNorm
    w1, b1 = _linear_params(next(keys), hidden_size, hidden_size)
    w2, b2 = _linear_params(next(keys), hidden_size, output_size)
    params += [w1, b1, w2, b2]
    return params


# ---------------------------------------------------------------------------
# Pure-JAX reference (mirrors the PyTorch forward; matmul operands rounded to
# bf16 with f32 accumulation exactly like the kernel, so the comparison isolates
# the structural transforms: dense-A aggregation, split W1, tiling, ping-pong
# buffering, output lane padding).
# ---------------------------------------------------------------------------
def reference_forward(x, senders, receivers, params, num_steps, hidden_size):
    bf16, f32 = jnp.bfloat16, jnp.float32

    def mmul(a, w):
        return jnp.dot(a.astype(bf16), w.astype(bf16), preferred_element_type=f32)

    def mlp_ln(h, w1, b1, w2, b2, g, be):
        h = jnp.maximum(mmul(h, w1) + b1, 0.0)
        h = mmul(h, w2) + b2
        mu = jnp.mean(h, axis=-1, keepdims=True)
        var = jnp.mean((h - mu) ** 2, axis=-1, keepdims=True)
        return (h - mu) / jnp.sqrt(var + LN_EPS) * g + be

    idx = 0
    enc = params[idx: idx + 6]; idx += 6
    h = mlp_ln(x, *enc)
    n = x.shape[0]
    for _ in range(num_steps):
        w1, b1, w2, b2, g, be = params[idx: idx + 6]; idx += 6
        msg = h.astype(bf16).astype(f32)[senders]          # same rounding the MXU sees
        agg = jnp.zeros((n, hidden_size), f32).at[receivers].add(msg)
        collected = jnp.concatenate([h, agg], axis=-1)
        h = h + mlp_ln(collected, w1, b1, w2, b2, g, be)   # residual
    dw1, db1, dw2, db2 = params[idx: idx + 4]
    d = jnp.maximum(mmul(h, dw1) + db1, 0.0)
    return mmul(d, dw2) + db2


# ---------------------------------------------------------------------------
if __name__ == "__main__":
    NODE_INPUT_SIZE = 48
    HIDDEN_SIZE = 32
    OUTPUT_SIZE = 3
    MESSAGE_PASSING_STEPS = 2

    root = jax.random.PRNGKey(0)
    k_g1, k_g2, k_p = jax.random.split(root, 3)
    params = build_params(k_p, NODE_INPUT_SIZE, HIDDEN_SIZE, OUTPUT_SIZE,
                          MESSAGE_PASSING_STEPS)

    def make_graph(key, n, e):
        kx, ke = jax.random.split(key)
        x = jax.random.normal(kx, (n, NODE_INPUT_SIZE), jnp.float32)
        edge_index = jax.random.randint(ke, (2, e), 0, n)   # row0 senders, row1 receivers
        senders, receivers = edge_index[0], edge_index[1]
        # Dense adjacency for scatter-sum aggregation: A[r, s] = #edges (s -> r)
        A = jnp.zeros((n, n), jnp.float32).at[receivers, senders].add(1.0)
        return x, senders, receivers, A

    # small graph (single 32-row tile, auto: VMEM-resident bf16 adjacency)
    g_small = make_graph(k_g1, 20, 64)
    # larger graph (4 node tiles) to exercise multi-tile, streamed-int8 and resident paths
    g_large = make_graph(k_g2, 200, 1200)

    cases = [
        (g_small, dict(tile_m=256, a_resident=None)),   # auto plan, resident A
        (g_large, dict(tile_m=64,  a_resident=False)),  # streamed int8 A, Buffered(3)
        (g_large, dict(tile_m=64,  a_resident=True)),   # resident A, multi-tile slicing
    ]
    for (x, senders, receivers, A), kw in cases:
        out = jax.block_until_ready(
            encoder_processor_decoder(x, A, params, MESSAGE_PASSING_STEPS,
                                      HIDDEN_SIZE, OUTPUT_SIZE, **kw))
        ref = jax.block_until_ready(
            reference_forward(x, senders, receivers, params,
                              MESSAGE_PASSING_STEPS, HIDDEN_SIZE))
        assert out.shape == (x.shape[0], OUTPUT_SIZE) and out.dtype == jnp.float32
        np.testing.assert_allclose(np.asarray(out), np.asarray(ref),
                                   rtol=5e-3, atol=1e-2)
    print("KERNEL_OK")
</pallas_src>

<mosaic_0001>
module attributes {stable_mosaic.version = 11 : i64} {
  func.func @_epd_kernel(%arg0: i32, %arg1: i32, %arg2: memref<32x48xf32, #tpu.memory_space<vmem>>, %arg3: memref<32x32xbf16, #tpu.memory_space<vmem>>, %arg4: memref<48x32xbf16, #tpu.memory_space<vmem>>, %arg5: memref<1x32xf32, #tpu.memory_space<vmem>>, %arg6: memref<32x32xbf16, #tpu.memory_space<vmem>>, %arg7: memref<1x32xf32, #tpu.memory_space<vmem>>, %arg8: memref<1x32xf32, #tpu.memory_space<vmem>>, %arg9: memref<1x32xf32, #tpu.memory_space<vmem>>, %arg10: memref<1x32x32xbf16, #tpu.memory_space<vmem>>, %arg11: memref<1x32x32xbf16, #tpu.memory_space<vmem>>, %arg12: memref<1x32x32xbf16, #tpu.memory_space<vmem>>, %arg13: memref<1x1x32xf32, #tpu.memory_space<vmem>>, %arg14: memref<1x1x32xf32, #tpu.memory_space<vmem>>, %arg15: memref<1x1x32xf32, #tpu.memory_space<vmem>>, %arg16: memref<1x1x32xf32, #tpu.memory_space<vmem>>, %arg17: memref<32x32xbf16, #tpu.memory_space<vmem>>, %arg18: memref<1x32xf32, #tpu.memory_space<vmem>>, %arg19: memref<32x128xbf16, #tpu.memory_space<vmem>>, %arg20: memref<1x128xf32, #tpu.memory_space<vmem>>, %arg21: memref<32x128xf32, #tpu.memory_space<vmem>>, %arg22: memref<64x32xf32, #tpu.memory_space<vmem>>, %arg23: memref<64x32xbf16, #tpu.memory_space<vmem>>) attributes {dimension_semantics = [#tpu.dimension_semantics<arbitrary>, #tpu.dimension_semantics<arbitrary>], iteration_bounds = array<i64: 4, 1>, scalar_prefetch = 0 : i64, scratch_operands = 2 : i64, tpu.core_type = #tpu.core_type<tc>, window_params = [{transform_indices = @transform_0, window_bounds = array<i64: 32, 48>}, {pipeline_mode = #tpu.pipeline_mode<synchronous>, transform_indices = @transform_1, window_bounds = array<i64: 32, 32>}, {pipeline_mode = #tpu.pipeline_mode<synchronous>, transform_indices = @transform_2, window_bounds = array<i64: 48, 32>}, {pipeline_mode = #tpu.pipeline_mode<synchronous>, transform_indices = @transform_3, window_bounds = array<i64: 1, 32>}, {pipeline_mode = #tpu.pipeline_mode<synchronous>, transform_indices = @transform_4, window_bounds = array<i64: 32, 32>}, {pipeline_mode = #tpu.pipeline_mode<synchronous>, transform_indices = @transform_5, window_bounds = array<i64: 1, 32>}, {pipeline_mode = #tpu.pipeline_mode<synchronous>, transform_indices = @transform_6, window_bounds = array<i64: 1, 32>}, {pipeline_mode = #tpu.pipeline_mode<synchronous>, transform_indices = @transform_7, window_bounds = array<i64: 1, 32>}, {transform_indices = @transform_8, window_bounds = array<i64: 1, 32, 32>}, {transform_indices = @transform_9, window_bounds = array<i64: 1, 32, 32>}, {transform_indices = @transform_10, window_bounds = array<i64: 1, 32, 32>}, {transform_indices = @transform_11, window_bounds = array<i64: 1, 1, 32>}, {transform_indices = @transform_12, window_bounds = array<i64: 1, 1, 32>}, {transform_indices = @transform_13, window_bounds = array<i64: 1, 1, 32>}, {transform_indices = @transform_14, window_bounds = array<i64: 1, 1, 32>}, {pipeline_mode = #tpu.pipeline_mode<synchronous>, transform_indices = @transform_15, window_bounds = array<i64: 32, 32>}, {pipeline_mode = #tpu.pipeline_mode<synchronous>, transform_indices = @transform_16, window_bounds = array<i64: 1, 32>}, {pipeline_mode = #tpu.pipeline_mode<synchronous>, transform_indices = @transform_17, window_bounds = array<i64: 32, 128>}, {pipeline_mode = #tpu.pipeline_mode<synchronous>, transform_indices = @transform_18, window_bounds = array<i64: 1, 128>}, {transform_indices = @transform_19, window_bounds = array<i64: 32, 128>}]} {
    %c32_i32 = arith.constant 32 : i32
    %0 = arith.muli %arg1, %c32_i32 : i32
    %1 = tpu.assume_multiple %0, 32 : i32
    %c0_i32 = arith.constant 0 : i32
    %2 = arith.cmpi eq, %arg0, %c0_i32 : i32
    %3 = arith.extui %2 : i1 to i32
    %c0_i32_0 = arith.constant 0 : i32
    %4 = arith.cmpi ne, %3, %c0_i32_0 : i32
    scf.if %4 {
      %c0 = arith.constant 0 : index
      %c0_3 = arith.constant 0 : index
      %13 = vector.load %arg2[%c0, %c0_3] : memref<32x48xf32, #tpu.memory_space<vmem>>, vector<32x48xf32>
      %c0_4 = arith.constant 0 : index
      %c0_5 = arith.constant 0 : index
      %14 = vector.load %arg4[%c0_4, %c0_5] : memref<48x32xbf16, #tpu.memory_space<vmem>>, vector<48x32xbf16>
      %15 = arith.truncf %13 : vector<32x48xf32> to vector<32x48xbf16>
      %cst = arith.constant dense<0.000000e+00> : vector<32x32xf32>
      %16 = tpu.matmul %15, %14, %cst {dimension_numbers = #tpu.dot_dimension_numbers<[1], [0], [0], [1], [0, 0, 1, 1], [], []>} : vector<32x48xbf16>, vector<48x32xbf16>, vector<32x32xf32> -> vector<32x32xf32>
      %c0_6 = arith.constant 0 : index
      %c0_7 = arith.constant 0 : index
      %17 = vector.load %arg5[%c0_6, %c0_7] : memref<1x32xf32, #tpu.memory_space<vmem>>, vector<1x32xf32>
      %18 = vector.broadcast %17 : vector<1x32xf32> to vector<32x32xf32>
      %19 = arith.addf %16, %18 : vector<32x32xf32>
      %cst_8 = arith.constant 0.000000e+00 : f32
      %20 = vector.broadcast %cst_8 : f32 to vector<32x32xf32>
      %21 = arith.maximumf %19, %20 : vector<32x32xf32>
      %c0_9 = arith.constant 0 : index
      %c0_10 = arith.constant 0 : index
      %22 = vector.load %arg6[%c0_9, %c0_10] : memref<32x32xbf16, #tpu.memory_space<vmem>>, vector<32x32xbf16>
      %23 = arith.truncf %21 : vector<32x32xf32> to vector<32x32xbf16>
      %cst_11 = arith.constant dense<0.000000e+00> : vector<32x32xf32>
      %24 = tpu.matmul %23, %22, %cst_11 {dimension_numbers = #tpu.dot_dimension_numbers<[1], [0], [0], [1], [0, 0, 1, 1], [], []>} : vector<32x32xbf16>, vector<32x32xbf16>, vector<32x32xf32> -> vector<32x32xf32>
      %c0_12 = arith.constant 0 : index
      %c0_13 = arith.constant 0 : index
      %25 = vector.load %arg7[%c0_12, %c0_13] : memref<1x32xf32, #tpu.memory_space<vmem>>, vector<1x32xf32>
      %26 = vector.broadcast %25 : vector<1x32xf32> to vector<32x32xf32>
      %27 = arith.addf %24, %26 : vector<32x32xf32>
      %c0_14 = arith.constant 0 : index
      %c0_15 = arith.constant 0 : index
      %28 = vector.load %arg8[%c0_14, %c0_15] : memref<1x32xf32, #tpu.memory_space<vmem>>, vector<1x32xf32>
      %c0_16 = arith.constant 0 : index
      %c0_17 = arith.constant 0 : index
      %29 = vector.load %arg9[%c0_16, %c0_17] : memref<1x32xf32, #tpu.memory_space<vmem>>, vector<1x32xf32>
      %cst_18 = arith.constant dense<0.000000e+00> : vector<32xf32>
      %30 = vector.multi_reduction <add>, %27, %cst_18 [1] : vector<32x32xf32> to vector<32xf32>
      %31 = vector.shape_cast %30 : vector<32xf32> to vector<32x1xf32>
      %cst_19 = arith.constant 3.200000e+01 : f32
      %32 = vector.broadcast %cst_19 : f32 to vector<32x1xf32>
      %33 = arith.divf %31, %32 : vector<32x1xf32>
      %34 = arith.mulf %27, %27 : vector<32x32xf32>
      %cst_20 = arith.constant dense<0.000000e+00> : vector<32xf32>
      %35 = vector.multi_reduction <add>, %34, %cst_20 [1] : vector<32x32xf32> to vector<32xf32>
      %36 = vector.shape_cast %35 : vector<32xf32> to vector<32x1xf32>
      %cst_21 = arith.constant 3.200000e+01 : f32
      %37 = vector.broadcast %cst_21 : f32 to vector<32x1xf32>
      %38 = arith.divf %36, %37 : vector<32x1xf32>
      %39 = arith.mulf %33, %33 : vector<32x1xf32>
      %40 = arith.subf %38, %39 : vector<32x1xf32>
      %cst_22 = arith.constant 0.000000e+00 : f32
      %41 = vector.broadcast %cst_22 : f32 to vector<32x1xf32>
      %42 = arith.maximumf %40, %41 : vector<32x1xf32>
      %43 = vector.broadcast %33 : vector<32x1xf32> to vector<32x32xf32>
      %44 = arith.subf %27, %43 : vector<32x32xf32>
      %cst_23 = arith.constant 9.99999974E-6 : f32
      %45 = vector.broadcast %cst_23 : f32 to vector<32x1xf32>
      %46 = arith.addf %42, %45 : vector<32x1xf32>
      %47 = math.rsqrt %46 : vector<32x1xf32>
      %48 = vector.broadcast %47 : vector<32x1xf32> to vector<32x32xf32>
      %49 = arith.mulf %44, %48 : vector<32x32xf32>
      %50 = vector.broadcast %28 : vector<1x32xf32> to vector<32x32xf32>
      %51 = arith.mulf %49, %50 : vector<32x32xf32>
      %52 = vector.broadcast %29 : vector<1x32xf32> to vector<32x32xf32>
      %53 = arith.addf %51, %52 : vector<32x32xf32>
      %54 = arith.index_cast %1 : i32 to index
      %c0_24 = arith.constant 0 : index
      %55 = vector.load %arg22[%54, %c0_24] : memref<64x32xf32, #tpu.memory_space<vmem>>, vector<32x32xf32>
      tpu.vector_store %arg22[%54, %c0_24], %53 {strides = array<i32>} : memref<64x32xf32, #tpu.memory_space<vmem>>, vector<32x32xf32>,
      %56 = arith.truncf %53 : vector<32x32xf32> to vector<32x32xbf16>
      %57 = arith.index_cast %1 : i32 to index
      %c0_25 = arith.constant 0 : index
      %58 = vector.load %arg23[%57, %c0_25] : memref<64x32xbf16, #tpu.memory_space<vmem>>, vector<32x32xbf16>
      tpu.vector_store %arg23[%57, %c0_25], %56 {strides = array<i32>} : memref<64x32xbf16, #tpu.memory_space<vmem>>, vector<32x32xbf16>,
      %cst_26 = arith.constant 0.000000e+00 : f32
      %59 = vector.broadcast %cst_26 : f32 to vector<32x128xf32>
      %c0_27 = arith.constant 0 : index
      %c0_28 = arith.constant 0 : index
      %60 = vector.load %arg21[%c0_27, %c0_28] : memref<32x128xf32, #tpu.memory_space<vmem>>, vector<32x128xf32>
      tpu.vector_store %arg21[%c0_27, %c0_28], %59 {strides = array<i32>} : memref<32x128xf32, #tpu.memory_space<vmem>>, vector<32x128xf32>,
    } else {
    }
    %c1_i32 = arith.constant 1 : i32
    %5 = arith.cmpi sge, %arg0, %c1_i32 : i32
    %c2_i32 = arith.constant 2 : i32
    %6 = arith.cmpi sle, %arg0, %c2_i32 : i32
    %7 = arith.andi %5, %6 : i1
    %8 = arith.extui %7 : i1 to i32
    %c0_i32_1 = arith.constant 0 : i32
    %9 = arith.cmpi ne, %8, %c0_i32_1 : i32
    scf.if %9 {
      %c1_i32_3 = arith.constant 1 : i32
      %13 = arith.subi %arg0, %c1_i32_3 : i32
      %c2_i32_4 = arith.constant 2 : i32
      %c0_i32_5 = arith.constant 0 : i32
      %14 = arith.cmpi eq, %c2_i32_4, %c0_i32_5 : i32
      %c1_i32_6 = arith.constant 1 : i32
      %15 = arith.select %14, %c1_i32_6, %c2_i32_4 : i32
      %16 = arith.remsi %13, %15 : i32
      %c0_i32_7 = arith.constant 0 : i32
      %17 = arith.cmpi ne, %16, %c0_i32_7 : i32
      %c0_i32_8 = arith.constant 0 : i32
      %18 = arith.cmpi slt, %16, %c0_i32_8 : i32
      %c0_i32_9 = arith.constant 0 : i32
      %19 = arith.cmpi slt, %15, %c0_i32_9 : i32
      %20 = arith.xori %18, %19 : i1
      %21 = arith.andi %20, %17 : i1
      %22 = arith.addi %16, %15 : i32
      %23 = arith.select %21, %22, %16 : i32
      %c32_i32_10 = arith.constant 32 : i32
      %24 = arith.muli %23, %c32_i32_10 : i32
      %c2_i32_11 = arith.constant 2 : i32
      %c0_i32_12 = arith.constant 0 : i32
      %25 = arith.cmpi eq, %c2_i32_11, %c0_i32_12 : i32
      %c1_i32_13 = arith.constant 1 : i32
      %26 = arith.select %25, %c1_i32_13, %c2_i32_11 : i32
      %27 = arith.remsi %arg0, %26 : i32
      %c0_i32_14 = arith.constant 0 : i32
      %28 = arith.cmpi ne, %27, %c0_i32_14 : i32
      %c0_i32_15 = arith.constant 0 : i32
      %29 = arith.cmpi slt, %27, %c0_i32_15 : i32
      %c0_i32_16 = arith.constant 0 : i32
      %30 = arith.cmpi slt, %26, %c0_i32_16 : i32
      %31 = arith.xori %29, %30 : i1
      %32 = arith.andi %31, %28 : i1
      %33 = arith.addi %27, %26 : i32
      %34 = arith.select %32, %33, %27 : i32
      %c32_i32_17 = arith.constant 32 : i32
      %35 = arith.muli %34, %c32_i32_17 : i32
      %36 = tpu.assume_multiple %24, 32 : i32
      %37 = arith.index_cast %36 : i32 to index
      %c0 = arith.constant 0 : index
      %38 = vector.load %arg23[%37, %c0] : memref<64x32xbf16, #tpu.memory_space<vmem>>, vector<32x32xbf16>
      %39 = arith.addi %24, %1 : i32
      %40 = tpu.assume_multiple %39, 32 : i32
      %41 = arith.index_cast %40 : i32 to index
      %c0_18 = arith.constant 0 : index
      %42 = vector.load %arg22[%41, %c0_18] : memref<64x32xf32, #tpu.memory_space<vmem>>, vector<32x32xf32>
      %43 = arith.index_cast %1 : i32 to index
      %c0_19 = arith.constant 0 : index
      %44 = vector.load %arg3[%43, %c0_19] : memref<32x32xbf16, #tpu.memory_space<vmem>>, vector<32x32xbf16>
      %cst = arith.constant dense<0.000000e+00> : vector<32x32xf32>
      %45 = tpu.matmul %44, %38, %cst {dimension_numbers = #tpu.dot_dimension_numbers<[1], [0], [0], [1], [0, 0, 1, 1], [], []>} : vector<32x32xbf16>, vector<32x32xbf16>, vector<32x32xf32> -> vector<32x32xf32>
      %c0_20 = arith.constant 0 : index
      %c0_21 = arith.constant 0 : index
      %c0_22 = arith.constant 0 : index
      %46 = vector.load %arg10[%c0_20, %c0_21, %c0_22] : memref<1x32x32xbf16, #tpu.memory_space<vmem>>, vector<1x32x32xbf16>
      %47 = vector.shape_cast %46 : vector<1x32x32xbf16> to vector<32x32xbf16>
      %48 = arith.truncf %42 : vector<32x32xf32> to vector<32x32xbf16>
      %cst_23 = arith.constant dense<0.000000e+00> : vector<32x32xf32>
      %49 = tpu.matmul %48, %47, %cst_23 {dimension_numbers = #tpu.dot_dimension_numbers<[1], [0], [0], [1], [0, 0, 1, 1], [], []>} : vector<32x32xbf16>, vector<32x32xbf16>, vector<32x32xf32> -> vector<32x32xf32>
      %c0_24 = arith.constant 0 : index
      %c0_25 = arith.constant 0 : index
      %c0_26 = arith.constant 0 : index
      %50 = vector.load %arg11[%c0_24, %c0_25, %c0_26] : memref<1x32x32xbf16, #tpu.memory_space<vmem>>, vector<1x32x32xbf16>
      %51 = vector.shape_cast %50 : vector<1x32x32xbf16> to vector<32x32xbf16>
      %52 = arith.truncf %45 : vector<32x32xf32> to vector<32x32xbf16>
      %cst_27 = arith.constant dense<0.000000e+00> : vector<32x32xf32>
      %53 = tpu.matmul %52, %51, %cst_27 {dimension_numbers = #tpu.dot_dimension_numbers<[1], [0], [0], [1], [0, 0, 1, 1], [], []>} : vector<32x32xbf16>, vector<32x32xbf16>, vector<32x32xf32> -> vector<32x32xf32>
      %54 = arith.addf %49, %53 : vector<32x32xf32>
      %c0_28 = arith.constant 0 : index
      %c0_29 = arith.constant 0 : index
      %c0_30 = arith.constant 0 : index
      %55 = vector.load %arg13[%c0_28, %c0_29, %c0_30] : memref<1x1x32xf32, #tpu.memory_space<vmem>>, vector<1x1x32xf32>
      %56 = vector.shape_cast %55 : vector<1x1x32xf32> to vector<1x32xf32>
      %57 = vector.broadcast %56 : vector<1x32xf32> to vector<32x32xf32>
      %58 = arith.addf %54, %57 : vector<32x32xf32>
      %cst_31 = arith.constant 0.000000e+00 : f32
      %59 = vector.broadcast %cst_31 : f32 to vector<32x32xf32>
      %60 = arith.maximumf %58, %59 : vector<32x32xf32>
      %c0_32 = arith.constant 0 : index
      %c0_33 = arith.constant 0 : index
      %c0_34 = arith.constant 0 : index
      %61 = vector.load %arg12[%c0_32, %c0_33, %c0_34] : memref<1x32x32xbf16, #tpu.memory_space<vmem>>, vector<1x32x32xbf16>
      %62 = vector.shape_cast %61 : vector<1x32x32xbf16> to vector<32x32xbf16>
      %63 = arith.truncf %60 : vector<32x32xf32> to vector<32x32xbf16>
      %cst_35 = arith.constant dense<0.000000e+00> : vector<32x32xf32>
      %64 = tpu.matmul %63, %62, %cst_35 {dimension_numbers = #tpu.dot_dimension_numbers<[1], [0], [0], [1], [0, 0, 1, 1], [], []>} : vector<32x32xbf16>, vector<32x32xbf16>, vector<32x32xf32> -> vector<32x32xf32>
      %c0_36 = arith.constant 0 : index
      %c0_37 = arith.constant 0 : index
      %c0_38 = arith.constant 0 : index
      %65 = vector.load %arg14[%c0_36, %c0_37, %c0_38] : memref<1x1x32xf32, #tpu.memory_space<vmem>>, vector<1x1x32xf32>
      %66 = vector.shape_cast %65 : vector<1x1x32xf32> to vector<1x32xf32>
      %67 = vector.broadcast %66 : vector<1x32xf32> to vector<32x32xf32>
      %68 = arith.addf %64, %67 : vector<32x32xf32>
      %c0_39 = arith.constant 0 : index
      %c0_40 = arith.constant 0 : index
      %c0_41 = arith.constant 0 : index
      %69 = vector.load %arg15[%c0_39, %c0_40, %c0_41] : memref<1x1x32xf32, #tpu.memory_space<vmem>>, vector<1x1x32xf32>
      %70 = vector.shape_cast %69 : vector<1x1x32xf32> to vector<1x32xf32>
      %c0_42 = arith.constant 0 : index
      %c0_43 = arith.constant 0 : index
      %c0_44 = arith.constant 0 : index
      %71 = vector.load %arg16[%c0_42, %c0_43, %c0_44] : memref<1x1x32xf32, #tpu.memory_space<vmem>>, vector<1x1x32xf32>
      %72 = vector.shape_cast %71 : vector<1x1x32xf32> to vector<1x32xf32>
      %cst_45 = arith.constant dense<0.000000e+00> : vector<32xf32>
      %73 = vector.multi_reduction <add>, %68, %cst_45 [1] : vector<32x32xf32> to vector<32xf32>
      %74 = vector.shape_cast %73 : vector<32xf32> to vector<32x1xf32>
      %cst_46 = arith.constant 3.200000e+01 : f32
      %75 = vector.broadcast %cst_46 : f32 to vector<32x1xf32>
      %76 = arith.divf %74, %75 : vector<32x1xf32>
      %77 = arith.mulf %68, %68 : vector<32x32xf32>
      %cst_47 = arith.constant dense<0.000000e+00> : vector<32xf32>
      %78 = vector.multi_reduction <add>, %77, %cst_47 [1] : vector<32x32xf32> to vector<32xf32>
      %79 = vector.shape_cast %78 : vector<32xf32> to vector<32x1xf32>
      %cst_48 = arith.constant 3.200000e+01 : f32
      %80 = vector.broadcast %cst_48 : f32 to vector<32x1xf32>
      %81 = arith.divf %79, %80 : vector<32x1xf32>
      %82 = arith.mulf %76, %76 : vector<32x1xf32>
      %83 = arith.subf %81, %82 : vector<32x1xf32>
      %cst_49 = arith.constant 0.000000e+00 : f32
      %84 = vector.broadcast %cst_49 : f32 to vector<32x1xf32>
      %85 = arith.maximumf %83, %84 : vector<32x1xf32>
      %86 = vector.broadcast %76 : vector<32x1xf32> to vector<32x32xf32>
      %87 = arith.subf %68, %86 : vector<32x32xf32>
      %cst_50 = arith.constant 9.99999974E-6 : f32
      %88 = vector.broadcast %cst_50 : f32 to vector<32x1xf32>
      %89 = arith.addf %85, %88 : vector<32x1xf32>
      %90 = math.rsqrt %89 : vector<32x1xf32>
      %91 = vector.broadcast %90 : vector<32x1xf32> to vector<32x32xf32>
      %92 = arith.mulf %87, %91 : vector<32x32xf32>
      %93 = vector.broadcast %70 : vector<1x32xf32> to vector<32x32xf32>
      %94 = arith.mulf %92, %93 : vector<32x32xf32>
      %95 = vector.broadcast %72 : vector<1x32xf32> to vector<32x32xf32>
      %96 = arith.addf %94, %95 : vector<32x32xf32>
      %97 = arith.addf %42, %96 : vector<32x32xf32>
      %98 = arith.addi %35, %1 : i32
      %99 = tpu.assume_multiple %98, 32 : i32
      %100 = arith.index_cast %99 : i32 to index
      %c0_51 = arith.constant 0 : index
      %101 = vector.load %arg22[%100, %c0_51] : memref<64x32xf32, #tpu.memory_space<vmem>>, vector<32x32xf32>
      tpu.vector_store %arg22[%100, %c0_51], %97 {strides = array<i32>} : memref<64x32xf32, #tpu.memory_space<vmem>>, vector<32x32xf32>,
      %102 = arith.truncf %97 : vector<32x32xf32> to vector<32x32xbf16>
      %103 = arith.index_cast %99 : i32 to index
      %c0_52 = arith.constant 0 : index
      %104 = vector.load %arg23[%103, %c0_52] : memref<64x32xbf16, #tpu.memory_space<vmem>>, vector<32x32xbf16>
      tpu.vector_store %arg23[%103, %c0_52], %102 {strides = array<i32>} : memref<64x32xbf16, #tpu.memory_space<vmem>>, vector<32x32xbf16>,
    } else {
    }
    %c3_i32 = arith.constant 3 : i32
    %10 = arith.cmpi eq, %arg0, %c3_i32 : i32
    %11 = arith.extui %10 : i1 to i32
    %c0_i32_2 = arith.constant 0 : i32
    %12 = arith.cmpi ne, %11, %c0_i32_2 : i32
    scf.if %12 {
      %c0_i32_3 = arith.constant 0 : i32
      %13 = arith.addi %c0_i32_3, %1 : i32
      %14 = tpu.assume_multiple %13, 32 : i32
      %15 = arith.index_cast %14 : i32 to index
      %c0 = arith.constant 0 : index
      %16 = vector.load %arg22[%15, %c0] : memref<64x32xf32, #tpu.memory_space<vmem>>, vector<32x32xf32>
      %c0_4 = arith.constant 0 : index
      %c0_5 = arith.constant 0 : index
      %17 = vector.load %arg17[%c0_4, %c0_5] : memref<32x32xbf16, #tpu.memory_space<vmem>>, vector<32x32xbf16>
      %18 = arith.truncf %16 : vector<32x32xf32> to vector<32x32xbf16>
      %cst = arith.constant dense<0.000000e+00> : vector<32x32xf32>
      %19 = tpu.matmul %18, %17, %cst {dimension_numbers = #tpu.dot_dimension_numbers<[1], [0], [0], [1], [0, 0, 1, 1], [], []>} : vector<32x32xbf16>, vector<32x32xbf16>, vector<32x32xf32> -> vector<32x32xf32>
      %c0_6 = arith.constant 0 : index
      %c0_7 = arith.constant 0 : index
      %20 = vector.load %arg18[%c0_6, %c0_7] : memref<1x32xf32, #tpu.memory_space<vmem>>, vector<1x32xf32>
      %21 = vector.broadcast %20 : vector<1x32xf32> to vector<32x32xf32>
      %22 = arith.addf %19, %21 : vector<32x32xf32>
      %cst_8 = arith.constant 0.000000e+00 : f32
      %23 = vector.broadcast %cst_8 : f32 to vector<32x32xf32>
      %24 = arith.maximumf %22, %23 : vector<32x32xf32>
      %c0_9 = arith.constant 0 : index
      %c0_10 = arith.constant 0 : index
      %25 = vector.load %arg19[%c0_9, %c0_10] : memref<32x128xbf16, #tpu.memory_space<vmem>>, vector<32x128xbf16>
      %26 = arith.truncf %24 : vector<32x32xf32> to vector<32x32xbf16>
      %cst_11 = arith.constant dense<0.000000e+00> : vector<32x128xf32>
      %27 = tpu.matmul %26, %25, %cst_11 {dimension_numbers = #tpu.dot_dimension_numbers<[1], [0], [0], [1], [0, 0, 1, 1], [], []>} : vector<32x32xbf16>, vector<32x128xbf16>, vector<32x128xf32> -> vector<32x128xf32>
      %c0_12 = arith.constant 0 : index
      %c0_13 = arith.constant 0 : index
      %28 = vector.load %arg20[%c0_12, %c0_13] : memref<1x128xf32, #tpu.memory_space<vmem>>, vector<1x128xf32>
      %29 = vector.broadcast %28 : vector<1x128xf32> to vector<32x128xf32>
      %30 = arith.addf %27, %29 : vector<32x128xf32>
      %c0_14 = arith.constant 0 : index
      %c0_15 = arith.constant 0 : index
      %31 = vector.load %arg21[%c0_14, %c0_15] : memref<32x128xf32, #tpu.memory_space<vmem>>, vector<32x128xf32>
      tpu.vector_store %arg21[%c0_14, %c0_15], %30 {strides = array<i32>} : memref<32x128xf32, #tpu.memory_space<vmem>>, vector<32x128xf32>,
    } else {
    }
    return
  }
  func.func @transform_0(%arg0: i32, %arg1: i32) -> (i32, i32) {
    %c0_i32 = arith.constant 0 : i32
    %0 = arith.cmpi eq, %arg0, %c0_i32 : i32
    %c0_i32_0 = arith.constant 0 : i32
    %1 = arith.select %0, %arg1, %c0_i32_0 : i32
    %c0_i32_1 = arith.constant 0 : i32
    %c0_i32_2 = arith.constant 0 : i32
    return %1, %c0_i32_1 : i32, i32
  }
  func.func @transform_1(%arg0: i32, %arg1: i32) -> (i32, i32) {
    %c0_i32 = arith.constant 0 : i32
    %c0_i32_0 = arith.constant 0 : i32
    %c0_i32_1 = arith.constant 0 : i32
    return %c0_i32, %c0_i32_0 : i32, i32
  }
  func.func @transform_2(%arg0: i32, %arg1: i32) -> (i32, i32) {
    %c0_i32 = arith.constant 0 : i32
    %c0_i32_0 = arith.constant 0 : i32
    %c0_i32_1 = arith.constant 0 : i32
    return %c0_i32, %c0_i32_0 : i32, i32
  }
  func.func @transform_3(%arg0: i32, %arg1: i32) -> (i32, i32) {
    %c0_i32 = arith.constant 0 : i32
    %c0_i32_0 = arith.constant 0 : i32
    %c0_i32_1 = arith.constant 0 : i32
    return %c0_i32, %c0_i32_0 : i32, i32
  }
  func.func @transform_4(%arg0: i32, %arg1: i32) -> (i32, i32) {
    %c0_i32 = arith.constant 0 : i32
    %c0_i32_0 = arith.constant 0 : i32
    %c0_i32_1 = arith.constant 0 : i32
    return %c0_i32, %c0_i32_0 : i32, i32
  }
  func.func @transform_5(%arg0: i32, %arg1: i32) -> (i32, i32) {
    %c0_i32 = arith.constant 0 : i32
    %c0_i32_0 = arith.constant 0 : i32
    %c0_i32_1 = arith.constant 0 : i32
    return %c0_i32, %c0_i32_0 : i32, i32
  }
  func.func @transform_6(%arg0: i32, %arg1: i32) -> (i32, i32) {
    %c0_i32 = arith.constant 0 : i32
    %c0_i32_0 = arith.constant 0 : i32
    %c0_i32_1 = arith.constant 0 : i32
    return %c0_i32, %c0_i32_0 : i32, i32
  }
  func.func @transform_7(%arg0: i32, %arg1: i32) -> (i32, i32) {
    %c0_i32 = arith.constant 0 : i32
    %c0_i32_0 = arith.constant 0 : i32
    %c0_i32_1 = arith.constant 0 : i32
    return %c0_i32, %c0_i32_0 : i32, i32
  }
  func.func @transform_8(%arg0: i32, %arg1: i32) -> (i32, i32, i32) {
    %c1_i32 = arith.constant 1 : i32
    %0 = arith.subi %arg0, %c1_i32 : i32
    %c0_i32 = arith.constant 0 : i32
    %c1_i32_0 = arith.constant 1 : i32
    %1 = arith.maxsi %c0_i32, %0 : i32
    %2 = arith.minsi %c1_i32_0, %1 : i32
    %c0_i32_1 = arith.constant 0 : i32
    %c0_i32_2 = arith.constant 0 : i32
    %c0_i32_3 = arith.constant 0 : i32
    return %2, %c0_i32_1, %c0_i32_2 : i32, i32, i32
  }
  func.func @transform_9(%arg0: i32, %arg1: i32) -> (i32, i32, i32) {
    %c1_i32 = arith.constant 1 : i32
    %0 = arith.subi %arg0, %c1_i32 : i32
    %c0_i32 = arith.constant 0 : i32
    %c1_i32_0 = arith.constant 1 : i32
    %1 = arith.maxsi %c0_i32, %0 : i32
    %2 = arith.minsi %c1_i32_0, %1 : i32
    %c0_i32_1 = arith.constant 0 : i32
    %c0_i32_2 = arith.constant 0 : i32
    %c0_i32_3 = arith.constant 0 : i32
    return %2, %c0_i32_1, %c0_i32_2 : i32, i32, i32
  }
  func.func @transform_10(%arg0: i32, %arg1: i32) -> (i32, i32, i32) {
    %c1_i32 = arith.constant 1 : i32
    %0 = arith.subi %arg0, %c1_i32 : i32
    %c0_i32 = arith.constant 0 : i32
    %c1_i32_0 = arith.constant 1 : i32
    %1 = arith.maxsi %c0_i32, %0 : i32
    %2 = arith.minsi %c1_i32_0, %1 : i32
    %c0_i32_1 = arith.constant 0 : i32
    %c0_i32_2 = arith.constant 0 : i32
    %c0_i32_3 = arith.constant 0 : i32
    return %2, %c0_i32_1, %c0_i32_2 : i32, i32, i32
  }
  func.func @transform_11(%arg0: i32, %arg1: i32) -> (i32, i32, i32) {
    %c1_i32 = arith.constant 1 : i32
    %0 = arith.subi %arg0, %c1_i32 : i32
    %c0_i32 = arith.constant 0 : i32
    %c1_i32_0 = arith.constant 1 : i32
    %1 = arith.maxsi %c0_i32, %0 : i32
    %2 = arith.minsi %c1_i32_0, %1 : i32
    %c0_i32_1 = arith.constant 0 : i32
    %c0_i32_2 = arith.constant 0 : i32
    %c0_i32_3 = arith.constant 0 : i32
    return %2, %c0_i32_1, %c0_i32_2 : i32, i32, i32
  }
  func.func @transform_12(%arg0: i32, %arg1: i32) -> (i32, i32, i32) {
    %c1_i32 = arith.constant 1 : i32
    %0 = arith.subi %arg0, %c1_i32 : i32
    %c0_i32 = arith.constant 0 : i32
    %c1_i32_0 = arith.constant 1 : i32
    %1 = arith.maxsi %c0_i32, %0 : i32
    %2 = arith.minsi %c1_i32_0, %1 : i32
    %c0_i32_1 = arith.constant 0 : i32
    %c0_i32_2 = arith.constant 0 : i32
    %c0_i32_3 = arith.constant 0 : i32
    return %2, %c0_i32_1, %c0_i32_2 : i32, i32, i32
  }
  func.func @transform_13(%arg0: i32, %arg1: i32) -> (i32, i32, i32) {
    %c1_i32 = arith.constant 1 : i32
    %0 = arith.subi %arg0, %c1_i32 : i32
    %c0_i32 = arith.constant 0 : i32
    %c1_i32_0 = arith.constant 1 : i32
    %1 = arith.maxsi %c0_i32, %0 : i32
    %2 = arith.minsi %c1_i32_0, %1 : i32
    %c0_i32_1 = arith.constant 0 : i32
    %c0_i32_2 = arith.constant 0 : i32
    %c0_i32_3 = arith.constant 0 : i32
    return %2, %c0_i32_1, %c0_i32_2 : i32, i32, i32
  }
  func.func @transform_14(%arg0: i32, %arg1: i32) -> (i32, i32, i32) {
    %c1_i32 = arith.constant 1 : i32
    %0 = arith.subi %arg0, %c1_i32 : i32
    %c0_i32 = arith.constant 0 : i32
    %c1_i32_0 = arith.constant 1 : i32
    %1 = arith.maxsi %c0_i32, %0 : i32
    %2 = arith.minsi %c1_i32_0, %1 : i32
    %c0_i32_1 = arith.constant 0 : i32
    %c0_i32_2 = arith.constant 0 : i32
    %c0_i32_3 = arith.constant 0 : i32
    return %2, %c0_i32_1, %c0_i32_2 : i32, i32, i32
  }
  func.func @transform_15(%arg0: i32, %arg1: i32) -> (i32, i32) {
    %c0_i32 = arith.constant 0 : i32
    %c0_i32_0 = arith.constant 0 : i32
    %c0_i32_1 = arith.constant 0 : i32
    return %c0_i32, %c0_i32_0 : i32, i32
  }
  func.func @transform_16(%arg0: i32, %arg1: i32) -> (i32, i32) {
    %c0_i32 = arith.constant 0 : i32
    %c0_i32_0 = arith.constant 0 : i32
    %c0_i32_1 = arith.constant 0 : i32
    return %c0_i32, %c0_i32_0 : i32, i32
  }
  func.func @transform_17(%arg0: i32, %arg1: i32) -> (i32, i32) {
    %c0_i32 = arith.constant 0 : i32
    %c0_i32_0 = arith.constant 0 : i32
    %c0_i32_1 = arith.constant 0 : i32
    return %c0_i32, %c0_i32_0 : i32, i32
  }
  func.func @transform_18(%arg0: i32, %arg1: i32) -> (i32, i32) {
    %c0_i32 = arith.constant 0 : i32
    %c0_i32_0 = arith.constant 0 : i32
    %c0_i32_1 = arith.constant 0 : i32
    return %c0_i32, %c0_i32_0 : i32, i32
  }
  func.func @transform_19(%arg0: i32, %arg1: i32) -> (i32, i32) {
    %c3_i32 = arith.constant 3 : i32
    %0 = arith.cmpi eq, %arg0, %c3_i32 : i32
    %c0_i32 = arith.constant 0 : i32
    %1 = arith.select %0, %arg1, %c0_i32 : i32
    %c0_i32_0 = arith.constant 0 : i32
    %c0_i32_1 = arith.constant 0 : i32
    return %1, %c0_i32_0 : i32, i32
  }
}

</mosaic_0001>

<llo_original>
// kernel: tpu_custom_call.1
$region0: #{tpu_custom_call.1}
  #allocation0 [shape = 'u32[]', space=smem, size = 0x4, offset = 0x4, fixed_abs, tag = 'smem constant byte address 0x4 - core index']
  #allocation1 [shape = 'u32[144,128]{1,0:T(1,128)}', space=vmem, size = 0x12000, scoped, tag = 'internal scratch']
  #allocation2 [shape = 'f32[64,32]{1,0:T(8,128)}', space=vmem, size = 0x8000, scoped, tag = 'scratch operand']
  #allocation3 [shape = 'bf16[64,32]{1,0:T(16,128)(2,1)}', space=vmem, size = 0x4000, scoped, tag = 'scratch operand']
  %s0 = inlined_call_operand.hbm [shape: f32[32,48], index: 0, kind: input, shape index: {}]
  %s1 = inlined_call_operand.hbm [shape: bf16[32,32], index: 1, kind: input, shape index: {}]
  %s2 = inlined_call_operand.hbm [shape: bf16[48,32], index: 2, kind: input, shape index: {}]
  %s3 = inlined_call_operand.hbm [shape: f32[1,32], index: 3, kind: input, shape index: {}]
  %s4 = inlined_call_operand.hbm [shape: bf16[32,32], index: 4, kind: input, shape index: {}]
  %s5 = inlined_call_operand.hbm [shape: f32[1,32], index: 5, kind: input, shape index: {}]
  %s6 = inlined_call_operand.hbm [shape: f32[1,32], index: 6, kind: input, shape index: {}]
  %s7 = inlined_call_operand.hbm [shape: f32[1,32], index: 7, kind: input, shape index: {}]
  %s8 = inlined_call_operand.hbm [shape: bf16[2,32,32], index: 8, kind: input, shape index: {}]
  %s9 = inlined_call_operand.hbm [shape: bf16[2,32,32], index: 9, kind: input, shape index: {}]
  %s10 = inlined_call_operand.hbm [shape: bf16[2,32,32], index: 10, kind: input, shape index: {}]
  %s11 = inlined_call_operand.hbm [shape: f32[2,1,32], index: 11, kind: input, shape index: {}]
  %s12 = inlined_call_operand.hbm [shape: f32[2,1,32], index: 12, kind: input, shape index: {}]
  %s13 = inlined_call_operand.hbm [shape: f32[2,1,32], index: 13, kind: input, shape index: {}]
  %s14 = inlined_call_operand.hbm [shape: f32[2,1,32], index: 14, kind: input, shape index: {}]
  %s15 = inlined_call_operand.hbm [shape: bf16[32,32], index: 15, kind: input, shape index: {}]
  %s16 = inlined_call_operand.hbm [shape: f32[1,32], index: 16, kind: input, shape index: {}]
  %s17 = inlined_call_operand.hbm [shape: bf16[32,128], index: 17, kind: input, shape index: {}]
  %s18 = inlined_call_operand.hbm [shape: f32[1,128], index: 18, kind: input, shape index: {}]
  %s19 = inlined_call_operand.hbm [shape: f32[32,128], index: 19, kind: output, shape index: {}]
  %s20 = sld [smem:[#allocation0]]
  $region197: #{tpu_custom_call.1} parent=0
    _
  %s22 = ssub.s32 1, %s20
  %s23 = scalar_select 0, %s22, %s20
  $region1: #{tpu_custom_call.1} parent=0
    #allocation4 [shape = 'u8[32768]{0}', space=vmem, size = 0x8000, scoped, tag = 'input window, operand 0']
    #allocation5 [shape = 's32[2]{0}', space=sflag, size = 0x8, scoped, tag = 'scoped memory for tpu_custom_call.1']
    #allocation6 [shape = 's32[2]{0}', space=sflag, size = 0x8, scoped, tag = 'scoped memory for tpu_custom_call.1']
    #allocation7 [shape = 'u8[8192]{0}', space=vmem, size = 0x2000, scoped, tag = 'input window, operand 1, single buffered']
    #allocation8 [shape = 's32[1]{0}', space=sflag, size = 0x4, scoped, tag = 'scoped memory for tpu_custom_call.1']
    #allocation9 [shape = 'u8[12288]{0}', space=vmem, size = 0x3000, scoped, tag = 'input window, operand 2, single buffered']
    #allocation10 [shape = 'u8[512]{0}', space=vmem, size = 0x400, scoped, tag = 'input window, operand 3, single buffered']
    #allocation11 [shape = 's32[1]{0}', space=sflag, size = 0x4, scoped, tag = 'scoped memory for tpu_custom_call.1']
    #allocation12 [shape = 'u8[8192]{0}', space=vmem, size = 0x2000, scoped, tag = 'input window, operand 4, single buffered']
    #allocation13 [shape = 'u8[512]{0}', space=vmem, size = 0x400, scoped, tag = 'input window, operand 5, single buffered']
    #allocation14 [shape = 's32[1]{0}', space=sflag, size = 0x4, scoped, tag = 'scoped memory for tpu_custom_call.1']
    #allocation15 [shape = 'u8[512]{0}', space=vmem, size = 0x400, scoped, tag = 'input window, operand 6, single buffered']
    #allocation16 [shape = 'u8[512]{0}', space=vmem, size = 0x400, scoped, tag = 'input window, operand 7, single buffered']
    #allocation17 [shape = 's32[1]{0}', space=sflag, size = 0x4, scoped, tag = 'scoped memory for tpu_custom_call.1']
    #allocation18 [shape = 'u8[16384]{0}', space=vmem, size = 0x4000, scoped, tag = 'input window, operand 8']
    #allocation19 [shape = 'u8[16384]{0}', space=vmem, size = 0x4000, scoped, tag = 'input window, operand 9']
    #allocation20 [shape = 'u8[16384]{0}', space=vmem, size = 0x4000, scoped, tag = 'input window, operand 10']
    #allocation21 [shape = 'u8[1024]{0}', space=vmem, size = 0x400, scoped, tag = 'input window, operand 11']
    #allocation22 [shape = 'u8[1024]{0}', space=vmem, size = 0x400, scoped, tag = 'input window, operand 12']
    #allocation23 [shape = 'u8[1024]{0}', space=vmem, size = 0x400, scoped, tag = 'input window, operand 13']
    #allocation24 [shape = 'u8[1024]{0}', space=vmem, size = 0x400, scoped, tag = 'input window, operand 14']
    #allocation25 [shape = 'u8[8192]{0}', space=vmem, size = 0x2000, scoped, tag = 'input window, operand 15, single buffered']
    #allocation26 [shape = 'u8[512]{0}', space=vmem, size = 0x400, scoped, tag = 'input window, operand 16, single buffered']
    #allocation27 [shape = 'u8[8192]{0}', space=vmem, size = 0x2000, scoped, tag = 'input window, operand 17, single buffered']
    #allocation28 [shape = 'u8[512]{0}', space=vmem, size = 0x400, scoped, tag = 'input window, operand 18, single buffered']
    #allocation29 [shape = 'u8[32768]{0}', space=vmem, size = 0x8000, scoped, tag = 'output window, operand 0']
    %24 = vsyncpa [#allocation5], 0
    %s25 = scalar_lea.sflag [#allocation5], 1
    %26 = vsyncpa %s25, 0
    %27 = vsyncpa [#allocation8], 0
    %28 = vsyncpa [#allocation11], 0
    %29 = vsyncpa [#allocation14], 0
    %30 = vsyncpa [#allocation17], 0
    %31 = vsyncpa [#allocation6], 0
    %s32 = scalar_lea.sflag [#allocation6], 1
    %33 = vsyncpa %s32, 0
    loop: start=0, step=1, limit=6
    $region2: #{tpu_custom_call.1} parent=1 // loop_pre_header
      _
    $region3: #{tpu_custom_call.1} parent=1 // loop_header
      %s35 = sphi 0, %s39
      %p36 = scmp.ge.s32.totalorder %s35, 6
      %s42 = sphi 0, %s54
      %s43 = sphi 0, %s50
      %s44 = sphi 0, %s42
      %s45 = sphi 0, %s43
      %s46 = sphi 0, %s44
      %s47 = sphi 0, %s45
      %s61 = sphi 0, %s63
      %s64 = sphi 0, %s61
      %s65 = sphi 0, %s64
      %s81 = sphi 0, %s65
      %s85 = sphi 0, %s85
      %s87 = sphi 0, %s85
      %s88 = sphi 0, %s87
      %s102 = sphi 0, %s88
      %s106 = sphi 0, %s106
      %s108 = sphi 0, %s106
      %s109 = sphi 0, %s108
      %s123 = sphi 0, %s109
      %s127 = sphi 0, %s127
      %s129 = sphi 0, %s127
      %s130 = sphi 0, %s129
      %s144 = sphi 0, %s130
      %s148 = sphi 0, %s148
      %s150 = sphi 0, %s148
      %s151 = sphi 0, %s150
      %s165 = sphi 0, %s151
      %s169 = sphi 0, %s169
      %s171 = sphi 0, %s169
      %s172 = sphi 0, %s171
      %s186 = sphi 0, %s172
      %s190 = sphi 0, %s190
      %s192 = sphi 0, %s190
      %s193 = sphi 0, %s192
      %s207 = sphi 0, %s193
      %s211 = sphi 0, %s211
      %s213 = sphi 0, %s211
      %s214 = sphi 0, %s213
      %s228 = sphi 0, %s214
      %s244 = sphi 0, %s246
      %s247 = sphi 0, %s244
      %s248 = sphi 0, %s247
      %s264 = sphi 0, %s248
      %s280 = sphi 0, %s282
      %s283 = sphi 0, %s280
      %s284 = sphi 0, %s283
      %s300 = sphi 0, %s284
      %s316 = sphi 0, %s318
      %s319 = sphi 0, %s316
      %s320 = sphi 0, %s319
      %s336 = sphi 0, %s320
      %s352 = sphi 0, %s354
      %s355 = sphi 0, %s352
      %s356 = sphi 0, %s355
      %s372 = sphi 0, %s356
      %s388 = sphi 0, %s390
      %s391 = sphi 0, %s388
      %s392 = sphi 0, %s391
      %s408 = sphi 0, %s392
      %s424 = sphi 0, %s426
      %s427 = sphi 0, %s424
      %s428 = sphi 0, %s427
      %s444 = sphi 0, %s428
      %s460 = sphi 0, %s462
      %s463 = sphi 0, %s460
      %s464 = sphi 0, %s463
      %s480 = sphi 0, %s464
      %s484 = sphi 0, %s484
      %s486 = sphi 0, %s484
      %s487 = sphi 0, %s486
      %s501 = sphi 0, %s487
      %s505 = sphi 0, %s505
      %s507 = sphi 0, %s505
      %s508 = sphi 0, %s507
      %s522 = sphi 0, %s508
      %s526 = sphi 0, %s526
      %s528 = sphi 0, %s526
      %s529 = sphi 0, %s528
      %s543 = sphi 0, %s529
      %s547 = sphi 0, %s547
      %s549 = sphi 0, %s547
      %s550 = sphi 0, %s549
      %s564 = sphi 0, %s550
      %s574 = sphi 0, %s576
      %s577 = sphi 0, %s574
      %s578 = sphi 0, %s577
      %s594 = sphi 0, %s578
    $region4: #{tpu_custom_call.1} parent=1 // loop_header_branch
      %38 = sbr.rel (%p36) target = $region8
    $region5: #{tpu_custom_call.1} parent=1 // loop_body
      %s40 = ssub.s32 %s35, 1
      %s41 = ssub.s32 %s35, 2
      %s48 = sadd.s32 1, %s43
      %p49 = scmp.ge.s32.totalorder %s48, 1
      %s50 = scalar_select %p49, 0, %s48
      %s51 = sadd.s32 1, %s42
      %s52 = scalar_select %p49, %s51, %s42
      %p53 = scmp.ge.s32.totalorder %s52, 4
      %s54 = scalar_select %p53, 0, %s52
      %p55 = scmp.eq.s32.totalorder %s42, 0
      %s56 = scalar_select %p55, %s43, 0
      %p57 = scmp.eq.s32.totalorder %s54, 0
      %s58 = scalar_select %p57, %s50, 0
      %s59 = ssub.s32 %s56, %s58
      %p60 = scmp.eq.s32.totalorder %s59, 0
      %s62 = sadd.s32 %s61, 1
      %s63 = scalar_select %p60, %s61, %s62
      %p66 = pneg %p60
      %p67 = scmp.eq.s32.totalorder %s35, 3
      %p68 = por %p66, %p67
      %p69 = scmp.ne.s32.totalorder %s61, %s64
      %p70 = scmp.eq.s32.totalorder %s35, 0
      %p71 = por %p69, %p70
      %p72 = scmp.ne.s32.totalorder %s61, %s64
      %p73 = scmp.eq.s32.totalorder %s40, 3
      %p74 = por %p72, %p73
      %p75 = scmp.ne.s32.totalorder %s64, %s65
      %p76 = scmp.eq.s32.totalorder %s40, 0
      %p77 = por %p75, %p76
      %p78 = scmp.ne.s32.totalorder %s64, %s65
      %p79 = scmp.eq.s32.totalorder %s41, 3
      %p80 = por %p78, %p79
      %p82 = scmp.ne.s32.totalorder %s65, %s81
      %p83 = scmp.eq.s32.totalorder %s41, 0
      %p84 = por %p82, %p83
      %s86 = sadd.s32 %s85, 1
      %p89 = scmp.eq.s32.totalorder %s35, 3
      %p90 = scmp.ne.s32.totalorder %s85, %s87
      %p91 = scmp.eq.s32.totalorder %s35, 0
      %p92 = por %p90, %p91
      %p93 = scmp.ne.s32.totalorder %s85, %s87
      %p94 = scmp.eq.s32.totalorder %s40, 3
      %p95 = por %p93, %p94
      %p96 = scmp.ne.s32.totalorder %s87, %s88
      %p97 = scmp.eq.s32.totalorder %s40, 0
      %p98 = por %p96, %p97
      %p99 = scmp.ne.s32.totalorder %s87, %s88
      %p100 = scmp.eq.s32.totalorder %s41, 3
      %p101 = por %p99, %p100
      %p103 = scmp.ne.s32.totalorder %s88, %s102
      %p104 = scmp.eq.s32.totalorder %s41, 0
      %p105 = por %p103, %p104
      %s107 = sadd.s32 %s106, 1
      %p110 = scmp.eq.s32.totalorder %s35, 3
      %p111 = scmp.ne.s32.totalorder %s106, %s108
      %p112 = scmp.eq.s32.totalorder %s35, 0
      %p113 = por %p111, %p112
      %p114 = scmp.ne.s32.totalorder %s106, %s108
      %p115 = scmp.eq.s32.totalorder %s40, 3
      %p116 = por %p114, %p115
      %p117 = scmp.ne.s32.totalorder %s108, %s109
      %p118 = scmp.eq.s32.totalorder %s40, 0
      %p119 = por %p117, %p118
      %p120 = scmp.ne.s32.totalorder %s108, %s109
      %p121 = scmp.eq.s32.totalorder %s41, 3
      %p122 = por %p120, %p121
      %p124 = scmp.ne.s32.totalorder %s109, %s123
      %p125 = scmp.eq.s32.totalorder %s41, 0
      %p126 = por %p124, %p125
      %s128 = sadd.s32 %s127, 1
      %p131 = scmp.eq.s32.totalorder %s35, 3
      %p132 = scmp.ne.s32.totalorder %s127, %s129
      %p133 = scmp.eq.s32.totalorder %s35, 0
      %p134 = por %p132, %p133
      %p135 = scmp.ne.s32.totalorder %s127, %s129
      %p136 = scmp.eq.s32.totalorder %s40, 3
      %p137 = por %p135, %p136
      %p138 = scmp.ne.s32.totalorder %s129, %s130
      %p139 = scmp.eq.s32.totalorder %s40, 0
      %p140 = por %p138, %p139
      %p141 = scmp.ne.s32.totalorder %s129, %s130
      %p142 = scmp.eq.s32.totalorder %s41, 3
      %p143 = por %p141, %p142
      %p145 = scmp.ne.s32.totalorder %s130, %s144
      %p146 = scmp.eq.s32.totalorder %s41, 0
      %p147 = por %p145, %p146
      %s149 = sadd.s32 %s148, 1
      %p152 = scmp.eq.s32.totalorder %s35, 3
      %p153 = scmp.ne.s32.totalorder %s148, %s150
      %p154 = scmp.eq.s32.totalorder %s35, 0
      %p155 = por %p153, %p154
      %p156 = scmp.ne.s32.totalorder %s148, %s150
      %p157 = scmp.eq.s32.totalorder %s40, 3
      %p158 = por %p156, %p157
      %p159 = scmp.ne.s32.totalorder %s150, %s151
      %p160 = scmp.eq.s32.totalorder %s40, 0
      %p161 = por %p159, %p160
      %p162 = scmp.ne.s32.totalorder %s150, %s151
      %p163 = scmp.eq.s32.totalorder %s41, 3
      %p164 = por %p162, %p163
      %p166 = scmp.ne.s32.totalorder %s151, %s165
      %p167 = scmp.eq.s32.totalorder %s41, 0
      %p168 = por %p166, %p167
      %s170 = sadd.s32 %s169, 1
      %p173 = scmp.eq.s32.totalorder %s35, 3
      %p174 = scmp.ne.s32.totalorder %s169, %s171
      %p175 = scmp.eq.s32.totalorder %s35, 0
      %p176 = por %p174, %p175
      %p177 = scmp.ne.s32.totalorder %s169, %s171
      %p178 = scmp.eq.s32.totalorder %s40, 3
      %p179 = por %p177, %p178
      %p180 = scmp.ne.s32.totalorder %s171, %s172
      %p181 = scmp.eq.s32.totalorder %s40, 0
      %p182 = por %p180, %p181
      %p183 = scmp.ne.s32.totalorder %s171, %s172
      %p184 = scmp.eq.s32.totalorder %s41, 3
      %p185 = por %p183, %p184
      %p187 = scmp.ne.s32.totalorder %s172, %s186
      %p188 = scmp.eq.s32.totalorder %s41, 0
      %p189 = por %p187, %p188
      %s191 = sadd.s32 %s190, 1
      %p194 = scmp.eq.s32.totalorder %s35, 3
      %p195 = scmp.ne.s32.totalorder %s190, %s192
      %p196 = scmp.eq.s32.totalorder %s35, 0
      %p197 = por %p195, %p196
      %p198 = scmp.ne.s32.totalorder %s190, %s192
      %p199 = scmp.eq.s32.totalorder %s40, 3
      %p200 = por %p198, %p199
      %p201 = scmp.ne.s32.totalorder %s192, %s193
      %p202 = scmp.eq.s32.totalorder %s40, 0
      %p203 = por %p201, %p202
      %p204 = scmp.ne.s32.totalorder %s192, %s193
      %p205 = scmp.eq.s32.totalorder %s41, 3
      %p206 = por %p204, %p205
      %p208 = scmp.ne.s32.totalorder %s193, %s207
      %p209 = scmp.eq.s32.totalorder %s41, 0
      %p210 = por %p208, %p209
      %s212 = sadd.s32 %s211, 1
      %p215 = scmp.eq.s32.totalorder %s35, 3
      %p216 = scmp.ne.s32.totalorder %s211, %s213
      %p217 = scmp.eq.s32.totalorder %s35, 0
      %p218 = por %p216, %p217
      %p219 = scmp.ne.s32.totalorder %s211, %s213
      %p220 = scmp.eq.s32.totalorder %s40, 3
      %p221 = por %p219, %p220
      %p222 = scmp.ne.s32.totalorder %s213, %s214
      %p223 = scmp.eq.s32.totalorder %s40, 0
      %p224 = por %p222, %p223
      %p225 = scmp.ne.s32.totalorder %s213, %s214
      %p226 = scmp.eq.s32.totalorder %s41, 3
      %p227 = por %p225, %p226
      %p229 = scmp.ne.s32.totalorder %s214, %s228
      %p230 = scmp.eq.s32.totalorder %s41, 0
      %p231 = por %p229, %p230
      %s232 = ssub.s32 %s42, 1
      %p233 = scmp.gt.s32.totalorder %s232, 0
      %s234 = scalar_select %p233, %s232, 0
      %p235 = scmp.lt.s32.totalorder %s234, 1
      %s236 = scalar_select %p235, %s234, 1
      %s237 = ssub.s32 %s54, 1
      %p238 = scmp.gt.s32.totalorder %s237, 0
      %s239 = scalar_select %p238, %s237, 0
      %p240 = scmp.lt.s32.totalorder %s239, 1
      %s241 = scalar_select %p240, %s239, 1
      %s242 = ssub.s32 %s236, %s241
      %p243 = scmp.eq.s32.totalorder %s242, 0
      %s245 = sadd.s32 %s244, 1
      %s246 = scalar_select %p243, %s244, %s245
      %p249 = pneg %p243
      %p250 = scmp.eq.s32.totalorder %s35, 3
      %p251 = por %p249, %p250
      %p252 = scmp.ne.s32.totalorder %s244, %s247
      %p253 = scmp.eq.s32.totalorder %s35, 0
      %p254 = por %p252, %p253
      %p255 = scmp.ne.s32.totalorder %s244, %s247
      %p256 = scmp.eq.s32.totalorder %s40, 3
      %p257 = por %p255, %p256
      %p258 = scmp.ne.s32.totalorder %s247, %s248
      %p259 = scmp.eq.s32.totalorder %s40, 0
      %p260 = por %p258, %p259
      %p261 = scmp.ne.s32.totalorder %s247, %s248
      %p262 = scmp.eq.s32.totalorder %s41, 3
      %p263 = por %p261, %p262
      %p265 = scmp.ne.s32.totalorder %s248, %s264
      %p266 = scmp.eq.s32.totalorder %s41, 0
      %p267 = por %p265, %p266
      %s268 = ssub.s32 %s42, 1
      %p269 = scmp.gt.s32.totalorder %s268, 0
      %s270 = scalar_select %p269, %s268, 0
      %p271 = scmp.lt.s32.totalorder %s270, 1
      %s272 = scalar_select %p271, %s270, 1
      %s273 = ssub.s32 %s54, 1
      %p274 = scmp.gt.s32.totalorder %s273, 0
      %s275 = scalar_select %p274, %s273, 0
      %p276 = scmp.lt.s32.totalorder %s275, 1
      %s277 = scalar_select %p276, %s275, 1
      %s278 = ssub.s32 %s272, %s277
      %p279 = scmp.eq.s32.totalorder %s278, 0
      %s281 = sadd.s32 %s280, 1
      %s282 = scalar_select %p279, %s280, %s281
      %p285 = pneg %p279
      %p286 = scmp.eq.s32.totalorder %s35, 3
      %p287 = por %p285, %p286
      %p288 = scmp.ne.s32.totalorder %s280, %s283
      %p289 = scmp.eq.s32.totalorder %s35, 0
      %p290 = por %p288, %p289
      %p291 = scmp.ne.s32.totalorder %s280, %s283
      %p292 = scmp.eq.s32.totalorder %s40, 3
      %p293 = por %p291, %p292
      %p294 = scmp.ne.s32.totalorder %s283, %s284
      %p295 = scmp.eq.s32.totalorder %s40, 0
      %p296 = por %p294, %p295
      %p297 = scmp.ne.s32.totalorder %s283, %s284
      %p298 = scmp.eq.s32.totalorder %s41, 3
      %p299 = por %p297, %p298
      %p301 = scmp.ne.s32.totalorder %s284, %s300
      %p302 = scmp.eq.s32.totalorder %s41, 0
      %p303 = por %p301, %p302
      %s304 = ssub.s32 %s42, 1
      %p305 = scmp.gt.s32.totalorder %s304, 0
      %s306 = scalar_select %p305, %s304, 0
      %p307 = scmp.lt.s32.totalorder %s306, 1
      %s308 = scalar_select %p307, %s306, 1
      %s309 = ssub.s32 %s54, 1
      %p310 = scmp.gt.s32.totalorder %s309, 0
      %s311 = scalar_select %p310, %s309, 0
      %p312 = scmp.lt.s32.totalorder %s311, 1
      %s313 = scalar_select %p312, %s311, 1
      %s314 = ssub.s32 %s308, %s313
      %p315 = scmp.eq.s32.totalorder %s314, 0
      %s317 = sadd.s32 %s316, 1
      %s318 = scalar_select %p315, %s316, %s317
      %p321 = pneg %p315
      %p322 = scmp.eq.s32.totalorder %s35, 3
      %p323 = por %p321, %p322
      %p324 = scmp.ne.s32.totalorder %s316, %s319
      %p325 = scmp.eq.s32.totalorder %s35, 0
      %p326 = por %p324, %p325
      %p327 = scmp.ne.s32.totalorder %s316, %s319
      %p328 = scmp.eq.s32.totalorder %s40, 3
      %p329 = por %p327, %p328
      %p330 = scmp.ne.s32.totalorder %s319, %s320
      %p331 = scmp.eq.s32.totalorder %s40, 0
      %p332 = por %p330, %p331
      %p333 = scmp.ne.s32.totalorder %s319, %s320
      %p334 = scmp.eq.s32.totalorder %s41, 3
      %p335 = por %p333, %p334
      %p337 = scmp.ne.s32.totalorder %s320, %s336
      %p338 = scmp.eq.s32.totalorder %s41, 0
      %p339 = por %p337, %p338
      %s340 = ssub.s32 %s42, 1
      %p341 = scmp.gt.s32.totalorder %s340, 0
      %s342 = scalar_select %p341, %s340, 0
      %p343 = scmp.lt.s32.totalorder %s342, 1
      %s344 = scalar_select %p343, %s342, 1
      %s345 = ssub.s32 %s54, 1
      %p346 = scmp.gt.s32.totalorder %s345, 0
      %s347 = scalar_select %p346, %s345, 0
      %p348 = scmp.lt.s32.totalorder %s347, 1
      %s349 = scalar_select %p348, %s347, 1
      %s350 = ssub.s32 %s344, %s349
      %p351 = scmp.eq.s32.totalorder %s350, 0
      %s353 = sadd.s32 %s352, 1
      %s354 = scalar_select %p351, %s352, %s353
      %p357 = pneg %p351
      %p358 = scmp.eq.s32.totalorder %s35, 3
      %p359 = por %p357, %p358
      %p360 = scmp.ne.s32.totalorder %s352, %s355
      %p361 = scmp.eq.s32.totalorder %s35, 0
      %p362 = por %p360, %p361
      %p363 = scmp.ne.s32.totalorder %s352, %s355
      %p364 = scmp.eq.s32.totalorder %s40, 3
      %p365 = por %p363, %p364
      %p366 = scmp.ne.s32.totalorder %s355, %s356
      %p367 = scmp.eq.s32.totalorder %s40, 0
      %p368 = por %p366, %p367
      %p369 = scmp.ne.s32.totalorder %s355, %s356
      %p370 = scmp.eq.s32.totalorder %s41, 3
      %p371 = por %p369, %p370
      %p373 = scmp.ne.s32.totalorder %s356, %s372
      %p374 = scmp.eq.s32.totalorder %s41, 0
      %p375 = por %p373, %p374
      %s376 = ssub.s32 %s42, 1
      %p377 = scmp.gt.s32.totalorder %s376, 0
      %s378 = scalar_select %p377, %s376, 0
      %p379 = scmp.lt.s32.totalorder %s378, 1
      %s380 = scalar_select %p379, %s378, 1
      %s381 = ssub.s32 %s54, 1
      %p382 = scmp.gt.s32.totalorder %s381, 0
      %s383 = scalar_select %p382, %s381, 0
      %p384 = scmp.lt.s32.totalorder %s383, 1
      %s385 = scalar_select %p384, %s383, 1
      %s386 = ssub.s32 %s380, %s385
      %p387 = scmp.eq.s32.totalorder %s386, 0
      %s389 = sadd.s32 %s388, 1
      %s390 = scalar_select %p387, %s388, %s389
      %p393 = pneg %p387
      %p394 = scmp.eq.s32.totalorder %s35, 3
      %p395 = por %p393, %p394
      %p396 = scmp.ne.s32.totalorder %s388, %s391
      %p397 = scmp.eq.s32.totalorder %s35, 0
      %p398 = por %p396, %p397
      %p399 = scmp.ne.s32.totalorder %s388, %s391
      %p400 = scmp.eq.s32.totalorder %s40, 3
      %p401 = por %p399, %p400
      %p402 = scmp.ne.s32.totalorder %s391, %s392
      %p403 = scmp.eq.s32.totalorder %s40, 0
      %p404 = por %p402, %p403
      %p405 = scmp.ne.s32.totalorder %s391, %s392
      %p406 = scmp.eq.s32.totalorder %s41, 3
      %p407 = por %p405, %p406
      %p409 = scmp.ne.s32.totalorder %s392, %s408
      %p410 = scmp.eq.s32.totalorder %s41, 0
      %p411 = por %p409, %p410
      %s412 = ssub.s32 %s42, 1
      %p413 = scmp.gt.s32.totalorder %s412, 0
      %s414 = scalar_select %p413, %s412, 0
      %p415 = scmp.lt.s32.totalorder %s414, 1
      %s416 = scalar_select %p415, %s414, 1
      %s417 = ssub.s32 %s54, 1
      %p418 = scmp.gt.s32.totalorder %s417, 0
      %s419 = scalar_select %p418, %s417, 0
      %p420 = scmp.lt.s32.totalorder %s419, 1
      %s421 = scalar_select %p420, %s419, 1
      %s422 = ssub.s32 %s416, %s421
      %p423 = scmp.eq.s32.totalorder %s422, 0
      %s425 = sadd.s32 %s424, 1
      %s426 = scalar_select %p423, %s424, %s425
      %p429 = pneg %p423
      %p430 = scmp.eq.s32.totalorder %s35, 3
      %p431 = por %p429, %p430
      %p432 = scmp.ne.s32.totalorder %s424, %s427
      %p433 = scmp.eq.s32.totalorder %s35, 0
      %p434 = por %p432, %p433
      %p435 = scmp.ne.s32.totalorder %s424, %s427
      %p436 = scmp.eq.s32.totalorder %s40, 3
      %p437 = por %p435, %p436
      %p438 = scmp.ne.s32.totalorder %s427, %s428
      %p439 = scmp.eq.s32.totalorder %s40, 0
      %p440 = por %p438, %p439
      %p441 = scmp.ne.s32.totalorder %s427, %s428
      %p442 = scmp.eq.s32.totalorder %s41, 3
      %p443 = por %p441, %p442
      %p445 = scmp.ne.s32.totalorder %s428, %s444
      %p446 = scmp.eq.s32.totalorder %s41, 0
      %p447 = por %p445, %p446
      %s448 = ssub.s32 %s42, 1
      %p449 = scmp.gt.s32.totalorder %s448, 0
      %s450 = scalar_select %p449, %s448, 0
      %p451 = scmp.lt.s32.totalorder %s450, 1
      %s452 = scalar_select %p451, %s450, 1
      %s453 = ssub.s32 %s54, 1
      %p454 = scmp.gt.s32.totalorder %s453, 0
      %s455 = scalar_select %p454, %s453, 0
      %p456 = scmp.lt.s32.totalorder %s455, 1
      %s457 = scalar_select %p456, %s455, 1
      %s458 = ssub.s32 %s452, %s457
      %p459 = scmp.eq.s32.totalorder %s458, 0
      %s461 = sadd.s32 %s460, 1
      %s462 = scalar_select %p459, %s460, %s461
      %p465 = pneg %p459
      %p466 = scmp.eq.s32.totalorder %s35, 3
      %p467 = por %p465, %p466
      %p468 = scmp.ne.s32.totalorder %s460, %s463
      %p469 = scmp.eq.s32.totalorder %s35, 0
      %p470 = por %p468, %p469
      %p471 = scmp.ne.s32.totalorder %s460, %s463
      %p472 = scmp.eq.s32.totalorder %s40, 3
      %p473 = por %p471, %p472
      %p474 = scmp.ne.s32.totalorder %s463, %s464
      %p475 = scmp.eq.s32.totalorder %s40, 0
      %p476 = por %p474, %p475
      %p477 = scmp.ne.s32.totalorder %s463, %s464
      %p478 = scmp.eq.s32.totalorder %s41, 3
      %p479 = por %p477, %p478
      %p481 = scmp.ne.s32.totalorder %s464, %s480
      %p482 = scmp.eq.s32.totalorder %s41, 0
      %p483 = por %p481, %p482
      %s485 = sadd.s32 %s484, 1
      %p488 = scmp.eq.s32.totalorder %s35, 3
      %p489 = scmp.ne.s32.totalorder %s484, %s486
      %p490 = scmp.eq.s32.totalorder %s35, 0
      %p491 = por %p489, %p490
      %p492 = scmp.ne.s32.totalorder %s484, %s486
      %p493 = scmp.eq.s32.totalorder %s40, 3
      %p494 = por %p492, %p493
      %p495 = scmp.ne.s32.totalorder %s486, %s487
      %p496 = scmp.eq.s32.totalorder %s40, 0
      %p497 = por %p495, %p496
      %p498 = scmp.ne.s32.totalorder %s486, %s487
      %p499 = scmp.eq.s32.totalorder %s41, 3
      %p500 = por %p498, %p499
      %p502 = scmp.ne.s32.totalorder %s487, %s501
      %p503 = scmp.eq.s32.totalorder %s41, 0
      %p504 = por %p502, %p503
      %s506 = sadd.s32 %s505, 1
      %p509 = scmp.eq.s32.totalorder %s35, 3
      %p510 = scmp.ne.s32.totalorder %s505, %s507
      %p511 = scmp.eq.s32.totalorder %s35, 0
      %p512 = por %p510, %p511
      %p513 = scmp.ne.s32.totalorder %s505, %s507
      %p514 = scmp.eq.s32.totalorder %s40, 3
      %p515 = por %p513, %p514
      %p516 = scmp.ne.s32.totalorder %s507, %s508
      %p517 = scmp.eq.s32.totalorder %s40, 0
      %p518 = por %p516, %p517
      %p519 = scmp.ne.s32.totalorder %s507, %s508
      %p520 = scmp.eq.s32.totalorder %s41, 3
      %p521 = por %p519, %p520
      %p523 = scmp.ne.s32.totalorder %s508, %s522
      %p524 = scmp.eq.s32.totalorder %s41, 0
      %p525 = por %p523, %p524
      %s527 = sadd.s32 %s526, 1
      %p530 = scmp.eq.s32.totalorder %s35, 3
      %p531 = scmp.ne.s32.totalorder %s526, %s528
      %p532 = scmp.eq.s32.totalorder %s35, 0
      %p533 = por %p531, %p532
      %p534 = scmp.ne.s32.totalorder %s526, %s528
      %p535 = scmp.eq.s32.totalorder %s40, 3
      %p536 = por %p534, %p535
      %p537 = scmp.ne.s32.totalorder %s528, %s529
      %p538 = scmp.eq.s32.totalorder %s40, 0
      %p539 = por %p537, %p538
      %p540 = scmp.ne.s32.totalorder %s528, %s529
      %p541 = scmp.eq.s32.totalorder %s41, 3
      %p542 = por %p540, %p541
      %p544 = scmp.ne.s32.totalorder %s529, %s543
      %p545 = scmp.eq.s32.totalorder %s41, 0
      %p546 = por %p544, %p545
      %s548 = sadd.s32 %s547, 1
      %p551 = scmp.eq.s32.totalorder %s35, 3
      %p552 = scmp.ne.s32.totalorder %s547, %s549
      %p553 = scmp.eq.s32.totalorder %s35, 0
      %p554 = por %p552, %p553
      %p555 = scmp.ne.s32.totalorder %s547, %s549
      %p556 = scmp.eq.s32.totalorder %s40, 3
      %p557 = por %p555, %p556
      %p558 = scmp.ne.s32.totalorder %s549, %s550
      %p559 = scmp.eq.s32.totalorder %s40, 0
      %p560 = por %p558, %p559
      %p561 = scmp.ne.s32.totalorder %s549, %s550
      %p562 = scmp.eq.s32.totalorder %s41, 3
      %p563 = por %p561, %p562
      %p565 = scmp.ne.s32.totalorder %s550, %s564
      %p566 = scmp.eq.s32.totalorder %s41, 0
      %p567 = por %p565, %p566
      %p568 = scmp.eq.s32.totalorder %s42, 3
      %s569 = scalar_select %p568, %s43, 0
      %p570 = scmp.eq.s32.totalorder %s54, 3
      %s571 = scalar_select %p570, %s50, 0
      %s572 = ssub.s32 %s569, %s571
      %p573 = scmp.eq.s32.totalorder %s572, 0
      %s575 = sadd.s32 %s574, 1
      %s576 = scalar_select %p573, %s574, %s575
      %p579 = pneg %p573
      %p580 = scmp.eq.s32.totalorder %s35, 3
      %p581 = por %p579, %p580
      %p582 = scmp.ne.s32.totalorder %s574, %s577
      %p583 = scmp.eq.s32.totalorder %s35, 0
      %p584 = por %p582, %p583
      %p585 = scmp.ne.s32.totalorder %s574, %s577
      %p586 = scmp.eq.s32.totalorder %s40, 3
      %p587 = por %p585, %p586
      %p588 = scmp.ne.s32.totalorder %s577, %s578
      %p589 = scmp.eq.s32.totalorder %s40, 0
      %p590 = por %p588, %p589
      %p591 = scmp.ne.s32.totalorder %s577, %s578
      %p592 = scmp.eq.s32.totalorder %s41, 3
      %p593 = por %p591, %p592
      %p595 = scmp.ne.s32.totalorder %s578, %s594
      %p596 = scmp.eq.s32.totalorder %s41, 0
      %p597 = por %p595, %p596
      %p598 = scmp.le.s32.totalorder 1, %s35
      %p599 = scmp.lt.s32.totalorder %s35, 5
      %p600 = pnand %p598, %p599
      %p601 = pneg %p600
      // Predicated region
      $region9: #{tpu_custom_call.1} parent=5 // pred_check
        _
      $region10: #{tpu_custom_call.1} parent=5 // pred_check_branch
        %603 = sbr.rel (%p600) target = $region12
      $region11: #{tpu_custom_call.1} parent=5 // pred_region
        %s604 = ssub.s32 %s35, 1
        // Predicated region
        $region13: #{tpu_custom_call.1} parent=11 // pred_check
          %p605 = pneg %p98
        $region14: #{tpu_custom_call.1} parent=11 // pred_check_branch
          %607 = sbr.rel (%p605) target = $region16
        $region15: #{tpu_custom_call.1} parent=11 // pred_region
          %s609 = ssub.s32 256, 256
          %610 = vsyncadd [#allocation8], %s609
          %s611 = sshll.u32 [#allocation7], 4
          %s612 = int_to_ptr.vmem [resolvable:$true] %s611
          %617 = dma.hbm_to_vmem [thread:$0]  %s1, 256, %s612, [#allocation8], 64, 64, 4
        $region16: #{tpu_custom_call.1} parent=11 // pred_fallthru
          _
        // Predicated region
        $region17: #{tpu_custom_call.1} parent=11 // pred_check
          %p618 = pneg %p119
        $region18: #{tpu_custom_call.1} parent=11 // pred_check_branch
          %620 = sbr.rel (%p618) target = $region20
        $region19: #{tpu_custom_call.1} parent=11 // pred_region
          %s622 = ssub.s32 384, 384
          %623 = vsyncadd [#allocation8], %s622
          %s624 = sshll.u32 [#allocation9], 4
          %s625 = int_to_ptr.vmem [resolvable:$true] %s624
          %630 = dma.hbm_to_vmem [thread:$0]  %s2, 384, %s625, [#allocation8], 64, 64, 4
        $region20: #{tpu_custom_call.1} parent=11 // pred_fallthru
          _
        // Predicated region
        $region21: #{tpu_custom_call.1} parent=11 // pred_check
          %p631 = pneg %p140
        $region22: #{tpu_custom_call.1} parent=11 // pred_check_branch
          %633 = sbr.rel (%p631) target = $region24
        $region23: #{tpu_custom_call.1} parent=11 // pred_region
          %s635 = ssub.s32 16, 16
          %636 = vsyncadd [#allocation11], %s635
          %s638 = sshll.u32 [#allocation10], 4
          %s639 = int_to_ptr.vmem [resolvable:$true] %s638
          %641 = dma.hbm_to_vmem [thread:$0]  %s3, 16, %s639, [#allocation11]
        $region24: #{tpu_custom_call.1} parent=11 // pred_fallthru
          _
        // Predicated region
        $region25: #{tpu_custom_call.1} parent=11 // pred_check
          %p642 = pneg %p161
        $region26: #{tpu_custom_call.1} parent=11 // pred_check_branch
          %644 = sbr.rel (%p642) target = $region28
        $region27: #{tpu_custom_call.1} parent=11 // pred_region
          %s646 = ssub.s32 256, 256
          %647 = vsyncadd [#allocation11], %s646
          %s648 = sshll.u32 [#allocation12], 4
          %s649 = int_to_ptr.vmem [resolvable:$true] %s648
          %654 = dma.hbm_to_vmem [thread:$0]  %s4, 256, %s649, [#allocation11], 64, 64, 4
        $region28: #{tpu_custom_call.1} parent=11 // pred_fallthru
          _
        // Predicated region
        $region29: #{tpu_custom_call.1} parent=11 // pred_check
          %p655 = pneg %p182
        $region30: #{tpu_custom_call.1} parent=11 // pred_check_branch
          %657 = sbr.rel (%p655) target = $region32
        $region31: #{tpu_custom_call.1} parent=11 // pred_region
          %s659 = ssub.s32 16, 16
          %660 = vsyncadd [#allocation14], %s659
          %s662 = sshll.u32 [#allocation13], 4
          %s663 = int_to_ptr.vmem [resolvable:$true] %s662
          %665 = dma.hbm_to_vmem [thread:$0]  %s5, 16, %s663, [#allocation14]
        $region32: #{tpu_custom_call.1} parent=11 // pred_fallthru
          _
        // Predicated region
        $region33: #{tpu_custom_call.1} parent=11 // pred_check
          %p666 = pneg %p203
        $region34: #{tpu_custom_call.1} parent=11 // pred_check_branch
          %668 = sbr.rel (%p666) target = $region36
        $region35: #{tpu_custom_call.1} parent=11 // pred_region
          %s670 = ssub.s32 16, 16
          %671 = vsyncadd [#allocation14], %s670
          %s673 = sshll.u32 [#allocation15], 4
          %s674 = int_to_ptr.vmem [resolvable:$true] %s673
          %676 = dma.hbm_to_vmem [thread:$0]  %s6, 16, %s674, [#allocation14]
        $region36: #{tpu_custom_call.1} parent=11 // pred_fallthru
          _
        // Predicated region
        $region37: #{tpu_custom_call.1} parent=11 // pred_check
          %p677 = pneg %p224
        $region38: #{tpu_custom_call.1} parent=11 // pred_check_branch
          %679 = sbr.rel (%p677) target = $region40
        $region39: #{tpu_custom_call.1} parent=11 // pred_region
          %s681 = ssub.s32 16, 16
          %682 = vsyncadd [#allocation17], %s681
          %s684 = sshll.u32 [#allocation16], 4
          %s685 = int_to_ptr.vmem [resolvable:$true] %s684
          %687 = dma.hbm_to_vmem [thread:$0]  %s7, 16, %s685, [#allocation17]
        $region40: #{tpu_custom_call.1} parent=11 // pred_fallthru
          _
        // Predicated region
        $region41: #{tpu_custom_call.1} parent=11 // pred_check
          %p688 = pneg %p497
        $region42: #{tpu_custom_call.1} parent=11 // pred_check_branch
          %690 = sbr.rel (%p688) target = $region44
        $region43: #{tpu_custom_call.1} parent=11 // pred_region
          %s692 = ssub.s32 256, 256
          %693 = vsyncadd [#allocation8], %s692
          %s694 = sshll.u32 [#allocation25], 4
          %s695 = int_to_ptr.vmem [resolvable:$true] %s694
          %700 = dma.hbm_to_vmem [thread:$0]  %s15, 256, %s695, [#allocation8], 64, 64, 4
        $region44: #{tpu_custom_call.1} parent=11 // pred_fallthru
          _
        // Predicated region
        $region45: #{tpu_custom_call.1} parent=11 // pred_check
          %p701 = pneg %p518
        $region46: #{tpu_custom_call.1} parent=11 // pred_check_branch
          %703 = sbr.rel (%p701) target = $region48
        $region47: #{tpu_custom_call.1} parent=11 // pred_region
          %s705 = ssub.s32 16, 16
          %706 = vsyncadd [#allocation11], %s705
          %s708 = sshll.u32 [#allocation26], 4
          %s709 = int_to_ptr.vmem [resolvable:$true] %s708
          %711 = dma.hbm_to_vmem [thread:$0]  %s16, 16, %s709, [#allocation11]
        $region48: #{tpu_custom_call.1} parent=11 // pred_fallthru
          _
        // Predicated region
        $region49: #{tpu_custom_call.1} parent=11 // pred_check
          %p712 = pneg %p539
        $region50: #{tpu_custom_call.1} parent=11 // pred_check_branch
          %714 = sbr.rel (%p712) target = $region52
        $region51: #{tpu_custom_call.1} parent=11 // pred_region
          %s716 = ssub.s32 256, 256
          %717 = vsyncadd [#allocation14], %s716
          %s718 = sshll.u32 [#allocation27], 4
          %s719 = int_to_ptr.vmem [resolvable:$true] %s718
          %724 = dma.hbm_to_vmem [thread:$0]  %s17, 256, %s719, [#allocation14], 64, 64, 4
        $region52: #{tpu_custom_call.1} parent=11 // pred_fallthru
          _
        // Predicated region
        $region53: #{tpu_custom_call.1} parent=11 // pred_check
          %p725 = pneg %p560
        $region54: #{tpu_custom_call.1} parent=11 // pred_check_branch
          %727 = sbr.rel (%p725) target = $region56
        $region55: #{tpu_custom_call.1} parent=11 // pred_region
          %s729 = ssub.s32 16, 16
          %730 = vsyncadd [#allocation17], %s729
          %s732 = sshll.u32 [#allocation28], 4
          %s733 = int_to_ptr.vmem [resolvable:$true] %s732
          %735 = dma.hbm_to_vmem [thread:$0]  %s18, 16, %s733, [#allocation17]
        $region56: #{tpu_custom_call.1} parent=11 // pred_fallthru
          _
      $region12: #{tpu_custom_call.1} parent=5 // pred_fallthru
        _
      %p736 = scmp.lt.s32.totalorder %s35, 4
      // Predicated region
      $region57: #{tpu_custom_call.1} parent=5 // pred_check
        %p737 = pneg %p736
      $region58: #{tpu_custom_call.1} parent=5 // pred_check_branch
        %739 = sbr.rel (%p737) target = $region60
      $region59: #{tpu_custom_call.1} parent=5 // pred_region
        // Predicated region
        $region61: #{tpu_custom_call.1} parent=59 // pred_check
          %p740 = pneg %p71
        $region62: #{tpu_custom_call.1} parent=59 // pred_check_branch
          %742 = sbr.rel (%p740) target = $region64
        $region63: #{tpu_custom_call.1} parent=59 // pred_region
          %s743 = sand.u32 %s35, 1
          %s744 = scalar_lea.sflag [#allocation5], %s743
          %s745 = sand.u32 %s61, 1
          %s746 = smul.addr %s745, 32
          %s747 = scalar_lea.vmem [#allocation4], %s746
          %p748 = scmp.eq.s32.totalorder %s42, 0
          %s749 = scalar_select %p748, %s43, 0
          %s750 = smul.u32 4, %s749
          %s752 = ssub.s32 512, 512
          %753 = vsyncadd %s744, %s752
          %s754 = smul.addr %s750, 128
          %s755 = scalar_lea.hbm %s0, %s754
          %s756 = sshll.u32 %s747, 4
          %s757 = int_to_ptr.vmem [resolvable:$true] %s756
          %762 = dma.hbm_to_vmem [thread:$0]  %s755, 512, %s757, %s744, 128, 128, 8
        $region64: #{tpu_custom_call.1} parent=59 // pred_fallthru
          _
        // Predicated region
        $region65: #{tpu_custom_call.1} parent=59 // pred_check
          %p763 = pneg %p254
        $region66: #{tpu_custom_call.1} parent=59 // pred_check_branch
          %765 = sbr.rel (%p763) target = $region68
        $region67: #{tpu_custom_call.1} parent=59 // pred_region
          %s766 = sand.u32 %s35, 1
          %s767 = scalar_lea.sflag [#allocation5], %s766
          %s768 = sand.u32 %s244, 1
          %s769 = smul.addr %s768, 16
          %s770 = scalar_lea.vmem [#allocation18], %s769
          %s771 = ssub.s32 %s42, 1
          %p772 = scmp.gt.s32.totalorder %s771, 0
          %s773 = scalar_select %p772, %s771, 0
          %p774 = scmp.lt.s32.totalorder %s773, 1
          %s775 = scalar_select %p774, %s773, 1
          %s777 = ssub.s32 256, 256
          %778 = vsyncadd %s767, %s777
          %s779 = smul.addr %s775, 4
          %s780 = smul.addr %s779, 64
          %s781 = scalar_lea.hbm %s8, %s780
          %s782 = sshll.u32 %s770, 4
          %s783 = int_to_ptr.vmem [resolvable:$true] %s782
          %788 = dma.hbm_to_vmem [thread:$0]  %s781, 256, %s783, %s767, 64, 64, 4
        $region68: #{tpu_custom_call.1} parent=59 // pred_fallthru
          _
        // Predicated region
        $region69: #{tpu_custom_call.1} parent=59 // pred_check
          %p789 = pneg %p290
        $region70: #{tpu_custom_call.1} parent=59 // pred_check_branch
          %791 = sbr.rel (%p789) target = $region72
        $region71: #{tpu_custom_call.1} parent=59 // pred_region
          %s792 = sand.u32 %s35, 1
          %s793 = scalar_lea.sflag [#allocation5], %s792
          %s794 = sand.u32 %s280, 1
          %s795 = smul.addr %s794, 16
          %s796 = scalar_lea.vmem [#allocation19], %s795
          %s797 = ssub.s32 %s42, 1
          %p798 = scmp.gt.s32.totalorder %s797, 0
          %s799 = scalar_select %p798, %s797, 0
          %p800 = scmp.lt.s32.totalorder %s799, 1
          %s801 = scalar_select %p800, %s799, 1
          %s803 = ssub.s32 256, 256
          %804 = vsyncadd %s793, %s803
          %s805 = smul.addr %s801, 4
          %s806 = smul.addr %s805, 64
          %s807 = scalar_lea.hbm %s9, %s806
          %s808 = sshll.u32 %s796, 4
          %s809 = int_to_ptr.vmem [resolvable:$true] %s808
          %814 = dma.hbm_to_vmem [thread:$0]  %s807, 256, %s809, %s793, 64, 64, 4
        $region72: #{tpu_custom_call.1} parent=59 // pred_fallthru
          _
        // Predicated region
        $region73: #{tpu_custom_call.1} parent=59 // pred_check
          %p815 = pneg %p326
        $region74: #{tpu_custom_call.1} parent=59 // pred_check_branch
          %817 = sbr.rel (%p815) target = $region76
        $region75: #{tpu_custom_call.1} parent=59 // pred_region
          %s818 = sand.u32 %s35, 1
          %s819 = scalar_lea.sflag [#allocation5], %s818
          %s820 = sand.u32 %s316, 1
          %s821 = smul.addr %s820, 16
          %s822 = scalar_lea.vmem [#allocation20], %s821
          %s823 = ssub.s32 %s42, 1
          %p824 = scmp.gt.s32.totalorder %s823, 0
          %s825 = scalar_select %p824, %s823, 0
          %p826 = scmp.lt.s32.totalorder %s825, 1
          %s827 = scalar_select %p826, %s825, 1
          %s829 = ssub.s32 256, 256
          %830 = vsyncadd %s819, %s829
          %s831 = smul.addr %s827, 4
          %s832 = smul.addr %s831, 64
          %s833 = scalar_lea.hbm %s10, %s832
          %s834 = sshll.u32 %s822, 4
          %s835 = int_to_ptr.vmem [resolvable:$true] %s834
          %840 = dma.hbm_to_vmem [thread:$0]  %s833, 256, %s835, %s819, 64, 64, 4
        $region76: #{tpu_custom_call.1} parent=59 // pred_fallthru
          _
        // Predicated region
        $region77: #{tpu_custom_call.1} parent=59 // pred_check
          %p841 = pneg %p362
        $region78: #{tpu_custom_call.1} parent=59 // pred_check_branch
          %843 = sbr.rel (%p841) target = $region80
        $region79: #{tpu_custom_call.1} parent=59 // pred_region
          %s844 = sand.u32 %s35, 1
          %s845 = scalar_lea.sflag [#allocation5], %s844
          %s846 = sand.u32 %s352, 1
          %s847 = scalar_lea.vmem [#allocation21], %s846
          %s848 = ssub.s32 %s42, 1
          %p849 = scmp.gt.s32.totalorder %s848, 0
          %s850 = scalar_select %p849, %s848, 0
          %p851 = scmp.lt.s32.totalorder %s850, 1
          %s852 = scalar_select %p851, %s850, 1
          %s854 = ssub.s32 16, 16
          %855 = vsyncadd %s845, %s854
          %s856 = smul.addr %s852, 16
          %s857 = scalar_lea.hbm %s11, %s856
          %s859 = sshll.u32 %s847, 4
          %s860 = int_to_ptr.vmem [resolvable:$true] %s859
          %862 = dma.hbm_to_vmem [thread:$0]  %s857, 16, %s860, %s845
        $region80: #{tpu_custom_call.1} parent=59 // pred_fallthru
          _
        // Predicated region
        $region81: #{tpu_custom_call.1} parent=59 // pred_check
          %p863 = pneg %p398
        $region82: #{tpu_custom_call.1} parent=59 // pred_check_branch
          %865 = sbr.rel (%p863) target = $region84
        $region83: #{tpu_custom_call.1} parent=59 // pred_region
          %s866 = sand.u32 %s35, 1
          %s867 = scalar_lea.sflag [#allocation5], %s866
          %s868 = sand.u32 %s388, 1
          %s869 = scalar_lea.vmem [#allocation22], %s868
          %s870 = ssub.s32 %s42, 1
          %p871 = scmp.gt.s32.totalorder %s870, 0
          %s872 = scalar_select %p871, %s870, 0
          %p873 = scmp.lt.s32.totalorder %s872, 1
          %s874 = scalar_select %p873, %s872, 1
          %s876 = ssub.s32 16, 16
          %877 = vsyncadd %s867, %s876
          %s878 = smul.addr %s874, 16
          %s879 = scalar_lea.hbm %s12, %s878
          %s881 = sshll.u32 %s869, 4
          %s882 = int_to_ptr.vmem [resolvable:$true] %s881
          %884 = dma.hbm_to_vmem [thread:$0]  %s879, 16, %s882, %s867
        $region84: #{tpu_custom_call.1} parent=59 // pred_fallthru
          _
        // Predicated region
        $region85: #{tpu_custom_call.1} parent=59 // pred_check
          %p885 = pneg %p434
        $region86: #{tpu_custom_call.1} parent=59 // pred_check_branch
          %887 = sbr.rel (%p885) target = $region88
        $region87: #{tpu_custom_call.1} parent=59 // pred_region
          %s888 = sand.u32 %s35, 1
          %s889 = scalar_lea.sflag [#allocation5], %s888
          %s890 = sand.u32 %s424, 1
          %s891 = scalar_lea.vmem [#allocation23], %s890
          %s892 = ssub.s32 %s42, 1
          %p893 = scmp.gt.s32.totalorder %s892, 0
          %s894 = scalar_select %p893, %s892, 0
          %p895 = scmp.lt.s32.totalorder %s894, 1
          %s896 = scalar_select %p895, %s894, 1
          %s898 = ssub.s32 16, 16
          %899 = vsyncadd %s889, %s898
          %s900 = smul.addr %s896, 16
          %s901 = scalar_lea.hbm %s13, %s900
          %s903 = sshll.u32 %s891, 4
          %s904 = int_to_ptr.vmem [resolvable:$true] %s903
          %906 = dma.hbm_to_vmem [thread:$0]  %s901, 16, %s904, %s889
        $region88: #{tpu_custom_call.1} parent=59 // pred_fallthru
          _
        // Predicated region
        $region89: #{tpu_custom_call.1} parent=59 // pred_check
          %p907 = pneg %p470
        $region90: #{tpu_custom_call.1} parent=59 // pred_check_branch
          %909 = sbr.rel (%p907) target = $region92
        $region91: #{tpu_custom_call.1} parent=59 // pred_region
          %s910 = sand.u32 %s35, 1
          %s911 = scalar_lea.sflag [#allocation5], %s910
          %s912 = sand.u32 %s460, 1
          %s913 = scalar_lea.vmem [#allocation24], %s912
          %s914 = ssub.s32 %s42, 1
          %p915 = scmp.gt.s32.totalorder %s914, 0
          %s916 = scalar_select %p915, %s914, 0
          %p917 = scmp.lt.s32.totalorder %s916, 1
          %s918 = scalar_select %p917, %s916, 1
          %s920 = ssub.s32 16, 16
          %921 = vsyncadd %s911, %s920
          %s922 = smul.addr %s918, 16
          %s923 = scalar_lea.hbm %s14, %s922
          %s925 = sshll.u32 %s913, 4
          %s926 = int_to_ptr.vmem [resolvable:$true] %s925
          %928 = dma.hbm_to_vmem [thread:$0]  %s923, 16, %s926, %s911
        $region92: #{tpu_custom_call.1} parent=59 // pred_fallthru
          _
      $region60: #{tpu_custom_call.1} parent=5 // pred_fallthru
        _
      %p929 = scmp.le.s32.totalorder 1, %s35
      %p930 = scmp.lt.s32.totalorder %s35, 5
      %p931 = pnand %p929, %p930
      %p932 = pneg %p931
      // Predicated region
      $region93: #{tpu_custom_call.1} parent=5 // pred_check
        _
      $region94: #{tpu_custom_call.1} parent=5 // pred_check_branch
        %934 = sbr.rel (%p931) target = $region96
      $region95: #{tpu_custom_call.1} parent=5 // pred_region
        %s935 = ssub.s32 %s35, 1
        %s936 = sand.u32 %s40, 1
        %s937 = scalar_lea.sflag [#allocation5], %s936
        %s938 = sand.u32 %s64, 1
        %s939 = smul.addr %s938, 32
        %s940 = scalar_lea.vmem [#allocation4], %s939
        // Predicated region
        $region97: #{tpu_custom_call.1} parent=95 // pred_check
          %p941 = pneg %p77
        $region98: #{tpu_custom_call.1} parent=95 // pred_check_branch
          %943 = sbr.rel (%p941) target = $region100
        $region99: #{tpu_custom_call.1} parent=95 // pred_region
          %944 = dma.done %s937, 512
        $region100: #{tpu_custom_call.1} parent=95 // pred_fallthru
          _
        // Predicated region
        $region101: #{tpu_custom_call.1} parent=95 // pred_check
          %p945 = pneg %p98
        $region102: #{tpu_custom_call.1} parent=95 // pred_check_branch
          %947 = sbr.rel (%p945) target = $region104
        $region103: #{tpu_custom_call.1} parent=95 // pred_region
          %948 = dma.done [#allocation8], 256
        $region104: #{tpu_custom_call.1} parent=95 // pred_fallthru
          _
        // Predicated region
        $region105: #{tpu_custom_call.1} parent=95 // pred_check
          %p949 = pneg %p119
        $region106: #{tpu_custom_call.1} parent=95 // pred_check_branch
          %951 = sbr.rel (%p949) target = $region108
        $region107: #{tpu_custom_call.1} parent=95 // pred_region
          %952 = dma.done [#allocation8], 384
        $region108: #{tpu_custom_call.1} parent=95 // pred_fallthru
          _
        // Predicated region
        $region109: #{tpu_custom_call.1} parent=95 // pred_check
          %p953 = pneg %p140
        $region110: #{tpu_custom_call.1} parent=95 // pred_check_branch
          %955 = sbr.rel (%p953) target = $region112
        $region111: #{tpu_custom_call.1} parent=95 // pred_region
          %956 = dma.done [#allocation11], 16
        $region112: #{tpu_custom_call.1} parent=95 // pred_fallthru
          _
        // Predicated region
        $region113: #{tpu_custom_call.1} parent=95 // pred_check
          %p957 = pneg %p161
        $region114: #{tpu_custom_call.1} parent=95 // pred_check_branch
          %959 = sbr.rel (%p957) target = $region116
        $region115: #{tpu_custom_call.1} parent=95 // pred_region
          %960 = dma.done [#allocation11], 256
        $region116: #{tpu_custom_call.1} parent=95 // pred_fallthru
          _
        // Predicated region
        $region117: #{tpu_custom_call.1} parent=95 // pred_check
          %p961 = pneg %p182
        $region118: #{tpu_custom_call.1} parent=95 // pred_check_branch
          %963 = sbr.rel (%p961) target = $region120
        $region119: #{tpu_custom_call.1} parent=95 // pred_region
          %964 = dma.done [#allocation14], 16
        $region120: #{tpu_custom_call.1} parent=95 // pred_fallthru
          _
        // Predicated region
        $region121: #{tpu_custom_call.1} parent=95 // pred_check
          %p965 = pneg %p203
        $region122: #{tpu_custom_call.1} parent=95 // pred_check_branch
          %967 = sbr.rel (%p965) target = $region124
        $region123: #{tpu_custom_call.1} parent=95 // pred_region
          %968 = dma.done [#allocation14], 16
        $region124: #{tpu_custom_call.1} parent=95 // pred_fallthru
          _
        // Predicated region
        $region125: #{tpu_custom_call.1} parent=95 // pred_check
          %p969 = pneg %p224
        $region126: #{tpu_custom_call.1} parent=95 // pred_check_branch
          %971 = sbr.rel (%p969) target = $region128
        $region127: #{tpu_custom_call.1} parent=95 // pred_region
          %972 = dma.done [#allocation17], 16
        $region128: #{tpu_custom_call.1} parent=95 // pred_fallthru
          _
        %s973 = sand.u32 %s40, 1
        %s974 = scalar_lea.sflag [#allocation5], %s973
        %s975 = sand.u32 %s247, 1
        %s976 = smul.addr %s975, 16
        %s977 = scalar_lea.vmem [#allocation18], %s976
        // Predicated region
        $region129: #{tpu_custom_call.1} parent=95 // pred_check
          %p978 = pneg %p260
        $region130: #{tpu_custom_call.1} parent=95 // pred_check_branch
          %980 = sbr.rel (%p978) target = $region132
        $region131: #{tpu_custom_call.1} parent=95 // pred_region
          %981 = dma.done %s974, 256
        $region132: #{tpu_custom_call.1} parent=95 // pred_fallthru
          _
        %s982 = sand.u32 %s40, 1
        %s983 = scalar_lea.sflag [#allocation5], %s982
        %s984 = sand.u32 %s283, 1
        %s985 = smul.addr %s984, 16
        %s986 = scalar_lea.vmem [#allocation19], %s985
        // Predicated region
        $region133: #{tpu_custom_call.1} parent=95 // pred_check
          %p987 = pneg %p296
        $region134: #{tpu_custom_call.1} parent=95 // pred_check_branch
          %989 = sbr.rel (%p987) target = $region136
        $region135: #{tpu_custom_call.1} parent=95 // pred_region
          %990 = dma.done %s983, 256
        $region136: #{tpu_custom_call.1} parent=95 // pred_fallthru
          _
        %s991 = sand.u32 %s40, 1
        %s992 = scalar_lea.sflag [#allocation5], %s991
        %s993 = sand.u32 %s319, 1
        %s994 = smul.addr %s993, 16
        %s995 = scalar_lea.vmem [#allocation20], %s994
        // Predicated region
        $region137: #{tpu_custom_call.1} parent=95 // pred_check
          %p996 = pneg %p332
        $region138: #{tpu_custom_call.1} parent=95 // pred_check_branch
          %998 = sbr.rel (%p996) target = $region140
        $region139: #{tpu_custom_call.1} parent=95 // pred_region
          %999 = dma.done %s992, 256
        $region140: #{tpu_custom_call.1} parent=95 // pred_fallthru
          _
        %s1000 = sand.u32 %s40, 1
        %s1001 = scalar_lea.sflag [#allocation5], %s1000
        %s1002 = sand.u32 %s355, 1
        %s1003 = scalar_lea.vmem [#allocation21], %s1002
        // Predicated region
        $region141: #{tpu_custom_call.1} parent=95 // pred_check
          %p1004 = pneg %p368
        $region142: #{tpu_custom_call.1} parent=95 // pred_check_branch
          %1006 = sbr.rel (%p1004) target = $region144
        $region143: #{tpu_custom_call.1} parent=95 // pred_region
          %1007 = dma.done %s1001, 16
        $region144: #{tpu_custom_call.1} parent=95 // pred_fallthru
          _
        %s1008 = sand.u32 %s40, 1
        %s1009 = scalar_lea.sflag [#allocation5], %s1008
        %s1010 = sand.u32 %s391, 1
        %s1011 = scalar_lea.vmem [#allocation22], %s1010
        // Predicated region
        $region145: #{tpu_custom_call.1} parent=95 // pred_check
          %p1012 = pneg %p404
        $region146: #{tpu_custom_call.1} parent=95 // pred_check_branch
          %1014 = sbr.rel (%p1012) target = $region148
        $region147: #{tpu_custom_call.1} parent=95 // pred_region
          %1015 = dma.done %s1009, 16
        $region148: #{tpu_custom_call.1} parent=95 // pred_fallthru
          _
        %s1016 = sand.u32 %s40, 1
        %s1017 = scalar_lea.sflag [#allocation5], %s1016
        %s1018 = sand.u32 %s427, 1
        %s1019 = scalar_lea.vmem [#allocation23], %s1018
        // Predicated region
        $region149: #{tpu_custom_call.1} parent=95 // pred_check
          %p1020 = pneg %p440
        $region150: #{tpu_custom_call.1} parent=95 // pred_check_branch
          %1022 = sbr.rel (%p1020) target = $region152
        $region151: #{tpu_custom_call.1} parent=95 // pred_region
          %1023 = dma.done %s1017, 16
        $region152: #{tpu_custom_call.1} parent=95 // pred_fallthru
          _
        %s1024 = sand.u32 %s40, 1
        %s1025 = scalar_lea.sflag [#allocation5], %s1024
        %s1026 = sand.u32 %s463, 1
        %s1027 = scalar_lea.vmem [#allocation24], %s1026
        // Predicated region
        $region153: #{tpu_custom_call.1} parent=95 // pred_check
          %p1028 = pneg %p476
        $region154: #{tpu_custom_call.1} parent=95 // pred_check_branch
          %1030 = sbr.rel (%p1028) target = $region156
        $region155: #{tpu_custom_call.1} parent=95 // pred_region
          %1031 = dma.done %s1025, 16
        $region156: #{tpu_custom_call.1} parent=95 // pred_fallthru
          _
        // Predicated region
        $region157: #{tpu_custom_call.1} parent=95 // pred_check
          %p1032 = pneg %p497
        $region158: #{tpu_custom_call.1} parent=95 // pred_check_branch
          %1034 = sbr.rel (%p1032) target = $region160
        $region159: #{tpu_custom_call.1} parent=95 // pred_region
          %1035 = dma.done [#allocation8], 256
        $region160: #{tpu_custom_call.1} parent=95 // pred_fallthru
          _
        // Predicated region
        $region161: #{tpu_custom_call.1} parent=95 // pred_check
          %p1036 = pneg %p518
        $region162: #{tpu_custom_call.1} parent=95 // pred_check_branch
          %1038 = sbr.rel (%p1036) target = $region164
        $region163: #{tpu_custom_call.1} parent=95 // pred_region
          %1039 = dma.done [#allocation11], 16
        $region164: #{tpu_custom_call.1} parent=95 // pred_fallthru
          _
        // Predicated region
        $region165: #{tpu_custom_call.1} parent=95 // pred_check
          %p1040 = pneg %p539
        $region166: #{tpu_custom_call.1} parent=95 // pred_check_branch
          %1042 = sbr.rel (%p1040) target = $region168
        $region167: #{tpu_custom_call.1} parent=95 // pred_region
          %1043 = dma.done [#allocation14], 256
        $region168: #{tpu_custom_call.1} parent=95 // pred_fallthru
          _
        // Predicated region
        $region169: #{tpu_custom_call.1} parent=95 // pred_check
          %p1044 = pneg %p560
        $region170: #{tpu_custom_call.1} parent=95 // pred_check_branch
          %1046 = sbr.rel (%p1044) target = $region172
        $region171: #{tpu_custom_call.1} parent=95 // pred_region
          %1047 = dma.done [#allocation17], 16
        $region172: #{tpu_custom_call.1} parent=95 // pred_fallthru
          _
        %s1048 = sand.u32 %s40, 1
        %s1049 = scalar_lea.sflag [#allocation5], %s1048
        %s1050 = sand.u32 %s64, 1
        %s1051 = smul.addr %s1050, 32
        %s1052 = scalar_lea.vmem [#allocation4], %s1051
        %p1053 = pneg %p77
        %p1054 = pneg %p74
        %p1055 = pneg %p98
        %p1056 = pneg %p95
        %p1057 = pneg %p119
        %p1058 = pneg %p116
        %p1059 = pneg %p140
        %p1060 = pneg %p137
        %p1061 = pneg %p161
        %p1062 = pneg %p158
        %p1063 = pneg %p182
        %p1064 = pneg %p179
        %p1065 = pneg %p203
        %p1066 = pneg %p200
        %p1067 = pneg %p224
        %p1068 = pneg %p221
        %s1069 = sand.u32 %s40, 1
        %s1070 = scalar_lea.sflag [#allocation5], %s1069
        %s1071 = sand.u32 %s247, 1
        %s1072 = smul.addr %s1071, 16
        %s1073 = scalar_lea.vmem [#allocation18], %s1072
        %p1074 = pneg %p260
        %p1075 = pneg %p257
        %s1076 = sand.u32 %s40, 1
        %s1077 = scalar_lea.sflag [#allocation5], %s1076
        %s1078 = sand.u32 %s283, 1
        %s1079 = smul.addr %s1078, 16
        %s1080 = scalar_lea.vmem [#allocation19], %s1079
        %p1081 = pneg %p296
        %p1082 = pneg %p293
        %s1083 = sand.u32 %s40, 1
        %s1084 = scalar_lea.sflag [#allocation5], %s1083
        %s1085 = sand.u32 %s319, 1
        %s1086 = smul.addr %s1085, 16
        %s1087 = scalar_lea.vmem [#allocation20], %s1086
        %p1088 = pneg %p332
        %p1089 = pneg %p329
        %s1090 = sand.u32 %s40, 1
        %s1091 = scalar_lea.sflag [#allocation5], %s1090
        %s1092 = sand.u32 %s355, 1
        %s1093 = scalar_lea.vmem [#allocation21], %s1092
        %p1094 = pneg %p368
        %p1095 = pneg %p365
        %s1096 = sand.u32 %s40, 1
        %s1097 = scalar_lea.sflag [#allocation5], %s1096
        %s1098 = sand.u32 %s391, 1
        %s1099 = scalar_lea.vmem [#allocation22], %s1098
        %p1100 = pneg %p404
        %p1101 = pneg %p401
        %s1102 = sand.u32 %s40, 1
        %s1103 = scalar_lea.sflag [#allocation5], %s1102
        %s1104 = sand.u32 %s427, 1
        %s1105 = scalar_lea.vmem [#allocation23], %s1104
        %p1106 = pneg %p440
        %p1107 = pneg %p437
        %s1108 = sand.u32 %s40, 1
        %s1109 = scalar_lea.sflag [#allocation5], %s1108
        %s1110 = sand.u32 %s463, 1
        %s1111 = scalar_lea.vmem [#allocation24], %s1110
        %p1112 = pneg %p476
        %p1113 = pneg %p473
        %p1114 = pneg %p497
        %p1115 = pneg %p494
        %p1116 = pneg %p518
        %p1117 = pneg %p515
        %p1118 = pneg %p539
        %p1119 = pneg %p536
        %p1120 = pneg %p560
        %p1121 = pneg %p557
        %p1122 = pneg %p590
        %p1123 = pneg %p587
        %s1124 = sand.u32 %s577, 1
        %s1125 = scalar_lea.sflag [#allocation6], %s1124
        %s1126 = sand.u32 %s577, 1
        %s1127 = smul.addr %s1126, 32
        %s1128 = scalar_lea.vmem [#allocation29], %s1127
        %p1129 = scmp.eq.s32.totalorder %s44, 0
        %s1130 = scalar_select %p1129, %s45, 0
        %s1131 = smul.u32 4, %s1130
        %s1132 = ssub.s32 %s44, 1
        %p1133 = scmp.gt.s32.totalorder %s1132, 0
        %s1134 = scalar_select %p1133, %s1132, 0
        %p1135 = scmp.lt.s32.totalorder %s1134, 1
        %s1136 = scalar_select %p1135, %s1134, 1
        %s1137 = ssub.s32 %s44, 1
        %p1138 = scmp.gt.s32.totalorder %s1137, 0
        %s1139 = scalar_select %p1138, %s1137, 0
        %p1140 = scmp.lt.s32.totalorder %s1139, 1
        %s1141 = scalar_select %p1140, %s1139, 1
        %s1142 = ssub.s32 %s44, 1
        %p1143 = scmp.gt.s32.totalorder %s1142, 0
        %s1144 = scalar_select %p1143, %s1142, 0
        %p1145 = scmp.lt.s32.totalorder %s1144, 1
        %s1146 = scalar_select %p1145, %s1144, 1
        %s1147 = ssub.s32 %s44, 1
        %p1148 = scmp.gt.s32.totalorder %s1147, 0
        %s1149 = scalar_select %p1148, %s1147, 0
        %p1150 = scmp.lt.s32.totalorder %s1149, 1
        %s1151 = scalar_select %p1150, %s1149, 1
        %s1152 = ssub.s32 %s44, 1
        %p1153 = scmp.gt.s32.totalorder %s1152, 0
        %s1154 = scalar_select %p1153, %s1152, 0
        %p1155 = scmp.lt.s32.totalorder %s1154, 1
        %s1156 = scalar_select %p1155, %s1154, 1
        %s1157 = ssub.s32 %s44, 1
        %p1158 = scmp.gt.s32.totalorder %s1157, 0
        %s1159 = scalar_select %p1158, %s1157, 0
        %p1160 = scmp.lt.s32.totalorder %s1159, 1
        %s1161 = scalar_select %p1160, %s1159, 1
        %s1162 = ssub.s32 %s44, 1
        %p1163 = scmp.gt.s32.totalorder %s1162, 0
        %s1164 = scalar_select %p1163, %s1162, 0
        %p1165 = scmp.lt.s32.totalorder %s1164, 1
        %s1166 = scalar_select %p1165, %s1164, 1
        %p1167 = scmp.eq.s32.totalorder %s44, 3
        %s1168 = scalar_select %p1167, %s45, 0
        %s1169 = smul.u32 4, %s1168
        %s1171 = smul.u32 %s45, 32
        %p1172 = scmp.eq.s32.totalorder %s44, 0
        // Predicated region
        $region173: #{tpu_custom_call.1} parent=95 // pred_check
          %p1173 = pneg %p1172
        $region174: #{tpu_custom_call.1} parent=95 // pred_check_branch
          %1175 = sbr.rel (%p1173) target = $region176
        $region175: #{tpu_custom_call.1} parent=95 // pred_region
          %v1176 = vld [vmem:[%s940] sm:$0xff]
          %v1177 = vld [vmem:[%s940 + $0x8] sm:$0xff]
          %v1178 = vld [vmem:[%s940 + $0x10] sm:$0xff]
          %v1179 = vld [vmem:[%s940 + $0x18] sm:$0xff]
          %v1180 = vld [vmem:[#allocation9] sm:$0xf]
          %v1181 = vld [vmem:[#allocation9 + $0x4] sm:$0xf]
          %v1182 = vld [vmem:[#allocation9 + $0x8] sm:$0xf]
          %v1183 = vld [vmem:[#allocation9 + $0xc] sm:$0xf]
          %v1184 = vld [vmem:[#allocation9 + $0x10] sm:$0xf]
          %v1185 = vld [vmem:[#allocation9 + $0x14] sm:$0xf]
          %v1186 = vpack.c.bf16 %v1177, %v1176
          %v1187 = vpack.c.bf16 %v1179, %v1178
          %v1188 = vld [vmem:[#allocation10] sm:$0x1]
          %v1190 = vlaneseq
          %v1191 = vshrl.u32 %v1190, 7
          %v1192 = vsub.s32 0, %v1191
          %v1193 = vrot.slane %v1188, %v1192
          %v1201 = vunpack.c.l.b16 %v1180
          %v1202 = vunpack.c.l.b16 %v1181
          %v1203 = vunpack.c.l.b16 %v1182
          %v1204 = vunpack.c.l.b16 %v1183
          %v1205 = vunpack.c.l.b16 %v1184
          %v1206 = vunpack.c.l.b16 %v1185
          %v1207 = vpack.c.b16 %v1202, %v1201
          %v1208 = vpack.c.b16 %v1204, %v1203
          %v1209 = vpack.c.b16 %v1206, %v1205
          %vm1213 = vcmask 392192
          %v1215 = vsel %vm1213, %v1186, 0
          %v1218 = vsel %vm1213, %v1187, 0
          %1220 = vmatprep.subr.bf16.mxu0 0
          %1221 = vmatpush1.bf16.msra.mxu0 %v1207
          %1222 = vmatprep.subr.bf16.mxu0 0
          %1223 = vmatpush1.bf16.msra.mxu0 %v1208
          %1224 = vmatprep.subr.bf16.mxu0 0
          %1225 = vmatpush1.bf16.msra.mxu0 %v1209
          %1226 = vmatprep.subr.bf16.mxu0 0
          %1227 = vmatpush1.bf16.msra.mxu0 0
          %1228 = vmatprep.subr.bf16.mxu0 0
          %1229 = vmatpush1.bf16.msra.mxu0 0
          %1230 = vmatprep.subr.bf16.mxu0 0
          %1231 = vmatpush1.bf16.msra.mxu0 0
          %1232 = vmatprep.subr.bf16.mxu0 0
          %1233 = vmatpush1.bf16.msra.mxu0 0
          %1234 = vmatprep.subr.bf16.mxu0 0
          %1235 = vmatpush1.bf16.msra.mxu0 0
          %1236 = vmatprep.subr.bf16.mxu0 0
          %1237 = vmatpush1.bf16.msra.mxu0 0
          %1238 = vmatprep.subr.bf16.mxu0 0
          %1239 = vmatpush1.bf16.msra.mxu0 0
          %1240 = vmatprep.subr.bf16.mxu0 0
          %1241 = vmatpush1.bf16.msra.mxu0 0
          %1242 = vmatprep.subr.bf16.mxu0 0
          %1243 = vmatpush1.bf16.msra.mxu0 0
          %1244 = vmatprep.subr.bf16.mxu0 0
          %1245 = vmatpush1.bf16.msra.mxu0 0
          %1246 = vmatprep.subr.bf16.mxu0 0
          %1247 = vmatpush1.bf16.msra.mxu0 0
          %1248 = vmatprep.subr.bf16.mxu0 0
          %1249 = vmatpush1.bf16.msra.mxu0 0
          %1250 = vmatprep.subr.bf16.mxu0 0
          %1251 = vmatpush1.bf16.msra.mxu0 0
          %1252 = vmatprep.mubr.bf16.mxu0 0
          %1253 = vmatmul.mubr.bf16.gmra.mrb[0].mxu0 %v1215
          %v1254 = vpop.f32.mrb[0].mxu0
          %v1255 = vadd.f32 %v1193, %v1254
          %v1256 = vpop.f32.mrb[0].mxu0
          %v1257 = vpop.f32.mrb[0].mxu0
          %v1258 = vadd.f32 %v1193, %v1257
          %v1259 = vpop.f32.mrb[0].mxu0
          %1260 = vmatprep.mubr.bf16.mxu0 0
          %1261 = vmatmul.mubr.bf16.gmra.mrb[0].mxu0 %v1218
          %v1262 = vpop.f32.mrb[0].mxu0
          %v1263 = vadd.f32 %v1193, %v1262
          %v1264 = vpop.f32.mrb[0].mxu0
          %v1265 = vpop.f32.mrb[0].mxu0
          %v1266 = vadd.f32 %v1193, %v1265
          %v1267 = vpop.f32.mrb[0].mxu0
          %1268 = vdwg.mxu0
          %v1269 = vmax.f32 %v1255, 0.0
          %v1270 = vmax.f32 %v1258, 0.0
          %v1271 = vmax.f32 %v1263, 0.0
          %v1272 = vmax.f32 %v1266, 0.0
          %v1273 = vld [vmem:[#allocation12] sm:$0xf]
          %v1274 = vld [vmem:[#allocation12 + $0x4] sm:$0xf]
          %v1275 = vld [vmem:[#allocation12 + $0x8] sm:$0xf]
          %v1276 = vld [vmem:[#allocation12 + $0xc] sm:$0xf]
          %v1277 = vpack.c.bf16 %v1270, %v1269
          %v1278 = vpack.c.bf16 %v1272, %v1271
          %v1279 = vld [vmem:[#allocation13] sm:$0x1]
          %v1281 = vlaneseq
          %v1282 = vshrl.u32 %v1281, 7
          %v1283 = vsub.s32 0, %v1282
          %v1284 = vrot.slane %v1279, %v1283
          %v1290 = vunpack.c.l.b16 %v1273
          %v1291 = vunpack.c.l.b16 %v1274
          %v1292 = vunpack.c.l.b16 %v1275
          %v1293 = vunpack.c.l.b16 %v1276
          %v1294 = vpack.c.b16 %v1291, %v1290
          %v1295 = vpack.c.b16 %v1293, %v1292
          %vm1298 = vcmask 261120
          %v1300 = vsel %vm1298, %v1277, 0
          %v1303 = vsel %vm1298, %v1278, 0
          %1305 = vmatprep.subr.bf16.mxu0 0
          %1306 = vmatpush1.bf16.msra.mxu0 %v1294
          %1307 = vmatprep.subr.bf16.mxu0 0
          %1308 = vmatpush1.bf16.msra.mxu0 %v1295
          %1309 = vmatprep.subr.bf16.mxu0 0
          %1310 = vmatpush1.bf16.msra.mxu0 0
          %1311 = vmatprep.subr.bf16.mxu0 0
          %1312 = vmatpush1.bf16.msra.mxu0 0
          %1313 = vmatprep.subr.bf16.mxu0 0
          %1314 = vmatpush1.bf16.msra.mxu0 0
          %1315 = vmatprep.subr.bf16.mxu0 0
          %1316 = vmatpush1.bf16.msra.mxu0 0
          %1317 = vmatprep.subr.bf16.mxu0 0
          %1318 = vmatpush1.bf16.msra.mxu0 0
          %1319 = vmatprep.subr.bf16.mxu0 0
          %1320 = vmatpush1.bf16.msra.mxu0 0
          %1321 = vmatprep.subr.bf16.mxu0 0
          %1322 = vmatpush1.bf16.msra.mxu0 0
          %1323 = vmatprep.subr.bf16.mxu0 0
          %1324 = vmatpush1.bf16.msra.mxu0 0
          %1325 = vmatprep.subr.bf16.mxu0 0
          %1326 = vmatpush1.bf16.msra.mxu0 0
          %1327 = vmatprep.subr.bf16.mxu0 0
          %1328 = vmatpush1.bf16.msra.mxu0 0
          %1329 = vmatprep.subr.bf16.mxu0 0
          %1330 = vmatpush1.bf16.msra.mxu0 0
          %1331 = vmatprep.subr.bf16.mxu0 0
          %1332 = vmatpush1.bf16.msra.mxu0 0
          %1333 = vmatprep.subr.bf16.mxu0 0
          %1334 = vmatpush1.bf16.msra.mxu0 0
          %1335 = vmatprep.subr.bf16.mxu0 0
          %1336 = vmatpush1.bf16.msra.mxu0 0
          %1337 = vmatprep.mubr.bf16.mxu0 0
          %1338 = vmatmul.mubr.bf16.gmra.mrb[0].mxu0 %v1300
          %v1339 = vpop.f32.mrb[0].mxu0
          %v1340 = vadd.f32 %v1284, %v1339
          %v1341 = vpop.f32.mrb[0].mxu0
          %v1342 = vpop.f32.mrb[0].mxu0
          %v1343 = vadd.f32 %v1284, %v1342
          %v1344 = vpop.f32.mrb[0].mxu0
          %1345 = vmatprep.mubr.bf16.mxu0 0
          %1346 = vmatmul.mubr.bf16.gmra.mrb[0].mxu0 %v1303
          %v1347 = vpop.f32.mrb[0].mxu0
          %v1348 = vadd.f32 %v1284, %v1347
          %v1349 = vpop.f32.mrb[0].mxu0
          %v1350 = vpop.f32.mrb[0].mxu0
          %v1351 = vadd.f32 %v1284, %v1350
          %v1352 = vpop.f32.mrb[0].mxu0
          %1353 = vdwg.mxu0
          %v1354 = vld [vmem:[#allocation15] sm:$0x1]
          %v1355 = vld [vmem:[#allocation16] sm:$0x1]
          %v1356 = vsel %vm1298, %v1340, 0.0
          %1357 = vadd.xlane.f32.xlu0 %v1356
          %v1358 = vpop.xlane.xlu0 %1357
          %v1359 = vsel %vm1298, %v1343, 0.0
          %1360 = vadd.xlane.f32.xlu0 %v1359
          %v1361 = vpop.xlane.xlu0 %1360
          %v1362 = vsel %vm1298, %v1348, 0.0
          %1363 = vadd.xlane.f32.xlu0 %v1362
          %v1364 = vpop.xlane.xlu0 %1363
          %v1365 = vsel %vm1298, %v1351, 0.0
          %1366 = vadd.xlane.f32.xlu0 %v1365
          %v1367 = vpop.xlane.xlu0 %1366
          %v1368 = vrcp.pop 32.0
          %v1369 = vmul.f32 %v1358, %v1368
          %v1370 = vmul.f32 %v1361, %v1368
          %v1371 = vmul.f32 %v1364, %v1368
          %v1372 = vmul.f32 %v1367, %v1368
          %v1373 = vmul.f32 %v1340, %v1340
          %v1374 = vmul.f32 %v1343, %v1343
          %v1375 = vmul.f32 %v1348, %v1348
          %v1376 = vmul.f32 %v1351, %v1351
          %v1377 = vsel %vm1298, %v1373, 0.0
          %1378 = vadd.xlane.f32.xlu0 %v1377
          %v1379 = vpop.xlane.xlu0 %1378
          %v1380 = vsel %vm1298, %v1374, 0.0
          %1381 = vadd.xlane.f32.xlu0 %v1380
          %v1382 = vpop.xlane.xlu0 %1381
          %v1383 = vsel %vm1298, %v1375, 0.0
          %1384 = vadd.xlane.f32.xlu0 %v1383
          %v1385 = vpop.xlane.xlu0 %1384
          %v1386 = vsel %vm1298, %v1376, 0.0
          %1387 = vadd.xlane.f32.xlu0 %v1386
          %v1388 = vpop.xlane.xlu0 %1387
          %v1389 = vmul.f32 %v1379, %v1368
          %v1390 = vmul.f32 %v1382, %v1368
          %v1391 = vmul.f32 %v1385, %v1368
          %v1392 = vmul.f32 %v1388, %v1368
          %v1393 = vmul.f32 %v1369, %v1369
          %v1394 = vmul.f32 %v1370, %v1370
          %v1395 = vmul.f32 %v1371, %v1371
          %v1396 = vmul.f32 %v1372, %v1372
          %v1397 = vsub.f32 %v1389, %v1393
          %v1398 = vsub.f32 %v1390, %v1394
          %v1399 = vsub.f32 %v1391, %v1395
          %v1400 = vsub.f32 %v1392, %v1396
          %v1401 = vmax.f32 %v1397, 0.0
          %v1402 = vmax.f32 %v1398, 0.0
          %v1403 = vmax.f32 %v1399, 0.0
          %v1404 = vmax.f32 %v1400, 0.0
          %v1405 = vsub.f32 %v1340, %v1369
          %v1406 = vsub.f32 %v1343, %v1370
          %v1407 = vsub.f32 %v1348, %v1371
          %v1408 = vsub.f32 %v1351, %v1372
          %v1409 = vadd.f32 %v1401, 1e-05
          %v1410 = vadd.f32 %v1402, 1e-05
          %v1411 = vadd.f32 %v1403, 1e-05
          %v1412 = vadd.f32 %v1404, 1e-05
          %v1413 = vrsqrt.pop %v1409
          %v1414 = vrsqrt.pop %v1410
          %v1415 = vrsqrt.pop %v1411
          %v1416 = vrsqrt.pop %v1412
          %v1417 = vmul.f32 %v1405, %v1413
          %v1418 = vmul.f32 %v1406, %v1414
          %v1419 = vmul.f32 %v1407, %v1415
          %v1420 = vmul.f32 %v1408, %v1416
          %v1422 = vlaneseq
          %v1423 = vshrl.u32 %v1422, 7
          %v1424 = vsub.s32 0, %v1423
          %v1425 = vrot.slane %v1354, %v1424
          %v1427 = vmul.f32 %v1417, %v1425
          %v1428 = vmul.f32 %v1418, %v1425
          %v1429 = vmul.f32 %v1419, %v1425
          %v1430 = vmul.f32 %v1420, %v1425
          %v1432 = vlaneseq
          %v1433 = vshrl.u32 %v1432, 7
          %v1434 = vsub.s32 0, %v1433
          %v1435 = vrot.slane %v1355, %v1434
          %v1437 = vadd.f32 %v1427, %v1435
          %v1438 = vadd.f32 %v1428, %v1435
          %v1439 = vadd.f32 %v1429, %v1435
          %v1440 = vadd.f32 %v1430, %v1435
          %s1441 = scalar_lea.vmem [#allocation2], %s1171
          %1442 = vst.msk [vmem:[%s1441] sm:$0xff] %vm1298, %v1437
          %1443 = vst.msk [vmem:[%s1441 + $0x8] sm:$0xff] %vm1298, %v1438
          %1444 = vst.msk [vmem:[%s1441 + $0x10] sm:$0xff] %vm1298, %v1439
          %1445 = vst.msk [vmem:[%s1441 + $0x18] sm:$0xff] %vm1298, %v1440
          %v1446 = vpack.c.bf16 %v1438, %v1437
          %v1447 = vpack.c.bf16 %v1440, %v1439
          %s1448 = sshra.s32 %s1171, 4
          %s1449 = sand.u32 %s1171, 15
          %s1450 = smul.addr %s1448, 8
          %s1451 = scalar_lea.vmem [#allocation3], %s1450
          %1452 = vst.msk [vmem:[%s1451] sm:$0xff] %vm1298, %v1446
          %1453 = vst.msk [vmem:[%s1451 + $0x8] sm:$0xff] %vm1298, %v1447
          %1454 = vst [vmem:[%s1128] sm:$0xff] 0.0
          %1455 = vst [vmem:[%s1128 + $0x8] sm:$0xff] 0.0
          %1456 = vst [vmem:[%s1128 + $0x10] sm:$0xff] 0.0
          %1457 = vst [vmem:[%s1128 + $0x18] sm:$0xff] 0.0
        $region176: #{tpu_custom_call.1} parent=95 // pred_fallthru
          _
        %p1458 = scmp.ge.s32.totalorder %s44, 1
        %p1459 = scmp.le.s32.totalorder %s44, 2
        %p1460 = pnand %p1458, %p1459
        %p1461 = pneg %p1460
        // Predicated region
        $region177: #{tpu_custom_call.1} parent=95 // pred_check
          _
        $region178: #{tpu_custom_call.1} parent=95 // pred_check_branch
          %1463 = sbr.rel (%p1460) target = $region180
        $region179: #{tpu_custom_call.1} parent=95 // pred_region
          %s1464 = ssub.s32 %s44, 1
          %p1465 = scmp.lt.s32.totalorder %s1464, 0
          %s1466 = ssub.s32 0, %s1464
          %s1467 = scalar_select %p1465, %s1466, %s1464
          %s1468 = sand.u32 %s1467, 1
          %s1469 = ssub.s32 0, %s1468
          %s1470 = scalar_select %p1465, %s1469, %s1468
          %p1471 = scmp.ne.s32.totalorder %s1470, 0
          %p1472 = scmp.lt.s32.totalorder %s1470, 0
          %p1473 = pnand %p1472, %p1471
          %p1474 = pneg %p1473
          %s1475 = sadd.s32 %s1470, 2
          %s1476 = scalar_select %p1474, %s1475, %s1470
          %s1477 = smul.u32 %s1476, 32
          %p1478 = scmp.lt.s32.totalorder %s44, 0
          %s1479 = ssub.s32 0, %s44
          %s1480 = scalar_select %p1478, %s1479, %s44
          %s1481 = sand.u32 %s1480, 1
          %s1482 = ssub.s32 0, %s1481
          %s1483 = scalar_select %p1478, %s1482, %s1481
          %p1484 = scmp.ne.s32.totalorder %s1483, 0
          %p1485 = scmp.lt.s32.totalorder %s1483, 0
          %p1486 = pnand %p1485, %p1484
          %p1487 = pneg %p1486
          %s1488 = sadd.s32 %s1483, 2
          %s1489 = scalar_select %p1487, %s1488, %s1483
          %s1490 = smul.u32 %s1489, 32
          %s1491 = sshra.s32 %s1477, 4
          %s1492 = sand.u32 %s1477, 15
          %s1493 = smul.addr %s1491, 8
          %s1494 = scalar_lea.vmem [#allocation3], %s1493
          %v1495 = vld [vmem:[%s1494] sm:$0xff]
          %v1496 = vld [vmem:[%s1494 + $0x8] sm:$0xff]
          %s1497 = sadd.s32 %s1477, %s1171
          %s1498 = scalar_lea.vmem [#allocation2], %s1497
          %v1499 = vld [vmem:[%s1498] sm:$0xff]
          %v1500 = vld [vmem:[%s1498 + $0x8] sm:$0xff]
          %v1501 = vld [vmem:[%s1498 + $0x10] sm:$0xff]
          %v1502 = vld [vmem:[%s1498 + $0x18] sm:$0xff]
          %s1503 = sshra.s32 %s1171, 3
          %s1504 = sand.u32 %s1171, 7
          %s1505 = smul.addr %s1503, 4
          %s1506 = scalar_lea.vmem [#allocation7], %s1505
          %v1507 = vld [vmem:[%s1506] sm:$0xf]
          %v1508 = vld [vmem:[%s1506 + $0x4] sm:$0xf]
          %v1509 = vld [vmem:[%s1506 + $0x8] sm:$0xf]
          %v1510 = vld [vmem:[%s1506 + $0xc] sm:$0xf]
          %v1515 = vunpack.c.l.b16 %v1507
          %v1516 = vunpack.c.l.b16 %v1508
          %v1517 = vunpack.c.l.b16 %v1509
          %v1518 = vunpack.c.l.b16 %v1510
          %v1519 = vpack.c.b16 %v1516, %v1515
          %v1520 = vpack.c.b16 %v1518, %v1517
          %vm1521 = vcmask 261120
          %v1523 = vsel %vm1521, %v1519, 0
          %v1526 = vsel %vm1521, %v1520, 0
          %1528 = vmatprep.subr.bf16.mxu0 0
          %1529 = vmatpush1.bf16.msra.mxu0 %v1495
          %1530 = vmatprep.subr.bf16.mxu0 0
          %1531 = vmatpush1.bf16.msra.mxu0 %v1496
          %1532 = vmatprep.subr.bf16.mxu0 0
          %1533 = vmatpush1.bf16.msra.mxu0 0
          %1534 = vmatprep.subr.bf16.mxu0 0
          %1535 = vmatpush1.bf16.msra.mxu0 0
          %1536 = vmatprep.subr.bf16.mxu0 0
          %1537 = vmatpush1.bf16.msra.mxu0 0
          %1538 = vmatprep.subr.bf16.mxu0 0
          %1539 = vmatpush1.bf16.msra.mxu0 0
          %1540 = vmatprep.subr.bf16.mxu0 0
          %1541 = vmatpush1.bf16.msra.mxu0 0
          %1542 = vmatprep.subr.bf16.mxu0 0
          %1543 = vmatpush1.bf16.msra.mxu0 0
          %1544 = vmatprep.subr.bf16.mxu0 0
          %1545 = vmatpush1.bf16.msra.mxu0 0
          %1546 = vmatprep.subr.bf16.mxu0 0
          %1547 = vmatpush1.bf16.msra.mxu0 0
          %1548 = vmatprep.subr.bf16.mxu0 0
          %1549 = vmatpush1.bf16.msra.mxu0 0
          %1550 = vmatprep.subr.bf16.mxu0 0
          %1551 = vmatpush1.bf16.msra.mxu0 0
          %1552 = vmatprep.subr.bf16.mxu0 0
          %1553 = vmatpush1.bf16.msra.mxu0 0
          %1554 = vmatprep.subr.bf16.mxu0 0
          %1555 = vmatpush1.bf16.msra.mxu0 0
          %1556 = vmatprep.subr.bf16.mxu0 0
          %1557 = vmatpush1.bf16.msra.mxu0 0
          %1558 = vmatprep.subr.bf16.mxu0 0
          %1559 = vmatpush1.bf16.msra.mxu0 0
          %1560 = vmatprep.mubr.bf16.mxu0 0
          %1561 = vmatmul.mubr.bf16.gmra.mrb[0].mxu0 %v1523
          %v1562 = vpop.f32.mrb[0].mxu0
          %v1563 = vadd.f32 0.0, %v1562
          %v1564 = vpop.f32.mrb[0].mxu0
          %v1565 = vpop.f32.mrb[0].mxu0
          %v1566 = vadd.f32 0.0, %v1565
          %v1567 = vpop.f32.mrb[0].mxu0
          %1568 = vmatprep.mubr.bf16.mxu0 0
          %1569 = vmatmul.mubr.bf16.gmra.mrb[0].mxu0 %v1526
          %v1570 = vpop.f32.mrb[0].mxu0
          %v1571 = vadd.f32 0.0, %v1570
          %v1572 = vpop.f32.mrb[0].mxu0
          %v1573 = vpop.f32.mrb[0].mxu0
          %v1574 = vadd.f32 0.0, %v1573
          %v1575 = vpop.f32.mrb[0].mxu0
          %1576 = vdwg.mxu0
          %v1577 = vld [vmem:[%s977] sm:$0xf]
          %v1578 = vld [vmem:[%s977 + $0x4] sm:$0xf]
          %v1579 = vld [vmem:[%s977 + $0x8] sm:$0xf]
          %v1580 = vld [vmem:[%s977 + $0xc] sm:$0xf]
          %v1581 = vpack.c.bf16 %v1500, %v1499
          %v1582 = vpack.c.bf16 %v1502, %v1501
          %v1583 = vld [vmem:[%s986] sm:$0xf]
          %v1584 = vld [vmem:[%s986 + $0x4] sm:$0xf]
          %v1585 = vld [vmem:[%s986 + $0x8] sm:$0xf]
          %v1586 = vld [vmem:[%s986 + $0xc] sm:$0xf]
          %v1587 = vpack.c.bf16 %v1566, %v1563
          %v1588 = vpack.c.bf16 %v1574, %v1571
          %v1593 = vunpack.c.l.b16 %v1583
          %v1594 = vunpack.c.l.b16 %v1584
          %v1595 = vunpack.c.l.b16 %v1585
          %v1596 = vunpack.c.l.b16 %v1586
          %v1597 = vpack.c.b16 %v1594, %v1593
          %v1598 = vpack.c.b16 %v1596, %v1595
          %v1602 = vsel %vm1521, %v1587, 0
          %v1605 = vsel %vm1521, %v1588, 0
          %1607 = vmatprep.subr.bf16.mxu0 0
          %1608 = vmatpush1.bf16.msra.mxu0 %v1597
          %1609 = vmatprep.subr.bf16.mxu0 0
          %1610 = vmatpush1.bf16.msra.mxu0 %v1598
          %1611 = vmatprep.subr.bf16.mxu0 0
          %1612 = vmatpush1.bf16.msra.mxu0 0
          %1613 = vmatprep.subr.bf16.mxu0 0
          %1614 = vmatpush1.bf16.msra.mxu0 0
          %1615 = vmatprep.subr.bf16.mxu0 0
          %1616 = vmatpush1.bf16.msra.mxu0 0
          %1617 = vmatprep.subr.bf16.mxu0 0
          %1618 = vmatpush1.bf16.msra.mxu0 0
          %1619 = vmatprep.subr.bf16.mxu0 0
          %1620 = vmatpush1.bf16.msra.mxu0 0
          %1621 = vmatprep.subr.bf16.mxu0 0
          %1622 = vmatpush1.bf16.msra.mxu0 0
          %1623 = vmatprep.subr.bf16.mxu0 0
          %1624 = vmatpush1.bf16.msra.mxu0 0
          %1625 = vmatprep.subr.bf16.mxu0 0
          %1626 = vmatpush1.bf16.msra.mxu0 0
          %1627 = vmatprep.subr.bf16.mxu0 0
          %1628 = vmatpush1.bf16.msra.mxu0 0
          %1629 = vmatprep.subr.bf16.mxu0 0
          %1630 = vmatpush1.bf16.msra.mxu0 0
          %1631 = vmatprep.subr.bf16.mxu0 0
          %1632 = vmatpush1.bf16.msra.mxu0 0
          %1633 = vmatprep.subr.bf16.mxu0 0
          %1634 = vmatpush1.bf16.msra.mxu0 0
          %1635 = vmatprep.subr.bf16.mxu0 0
          %1636 = vmatpush1.bf16.msra.mxu0 0
          %1637 = vmatprep.subr.bf16.mxu0 0
          %1638 = vmatpush1.bf16.msra.mxu0 0
          %1639 = vmatprep.mubr.bf16.mxu0 0
          %1640 = vmatmul.mubr.bf16.gmra.mrb[0].mxu0 %v1602
          %v1641 = vpop.f32.mrb[0].mxu0
          %v1642 = vadd.f32 0.0, %v1641
          %v1643 = vpop.f32.mrb[0].mxu0
          %v1644 = vpop.f32.mrb[0].mxu0
          %v1645 = vadd.f32 0.0, %v1644
          %v1646 = vpop.f32.mrb[0].mxu0
          %1647 = vmatprep.mubr.bf16.mxu0 0
          %1648 = vmatmul.mubr.bf16.gmra.mrb[0].mxu0 %v1605
          %v1649 = vpop.f32.mrb[0].mxu0
          %v1650 = vadd.f32 0.0, %v1649
          %v1651 = vpop.f32.mrb[0].mxu0
          %v1652 = vpop.f32.mrb[0].mxu0
          %v1653 = vadd.f32 0.0, %v1652
          %v1654 = vpop.f32.mrb[0].mxu0
          %1655 = vdwg.mxu0
          %v1660 = vunpack.c.l.b16 %v1577
          %v1661 = vunpack.c.l.b16 %v1578
          %v1662 = vunpack.c.l.b16 %v1579
          %v1663 = vunpack.c.l.b16 %v1580
          %v1664 = vpack.c.b16 %v1661, %v1660
          %v1665 = vpack.c.b16 %v1663, %v1662
          %v1669 = vsel %vm1521, %v1581, 0
          %v1672 = vsel %vm1521, %v1582, 0
          %1674 = vmatprep.subr.bf16.mxu0 0
          %1675 = vmatpush1.bf16.msra.mxu0 %v1664
          %1676 = vmatprep.subr.bf16.mxu0 0
          %1677 = vmatpush1.bf16.msra.mxu0 %v1665
          %1678 = vmatprep.subr.bf16.mxu0 0
          %1679 = vmatpush1.bf16.msra.mxu0 0
          %1680 = vmatprep.subr.bf16.mxu0 0
          %1681 = vmatpush1.bf16.msra.mxu0 0
          %1682 = vmatprep.subr.bf16.mxu0 0
          %1683 = vmatpush1.bf16.msra.mxu0 0
          %1684 = vmatprep.subr.bf16.mxu0 0
          %1685 = vmatpush1.bf16.msra.mxu0 0
          %1686 = vmatprep.subr.bf16.mxu0 0
          %1687 = vmatpush1.bf16.msra.mxu0 0
          %1688 = vmatprep.subr.bf16.mxu0 0
          %1689 = vmatpush1.bf16.msra.mxu0 0
          %1690 = vmatprep.subr.bf16.mxu0 0
          %1691 = vmatpush1.bf16.msra.mxu0 0
          %1692 = vmatprep.subr.bf16.mxu0 0
          %1693 = vmatpush1.bf16.msra.mxu0 0
          %1694 = vmatprep.subr.bf16.mxu0 0
          %1695 = vmatpush1.bf16.msra.mxu0 0
          %1696 = vmatprep.subr.bf16.mxu0 0
          %1697 = vmatpush1.bf16.msra.mxu0 0
          %1698 = vmatprep.subr.bf16.mxu0 0
          %1699 = vmatpush1.bf16.msra.mxu0 0
          %1700 = vmatprep.subr.bf16.mxu0 0
          %1701 = vmatpush1.bf16.msra.mxu0 0
          %1702 = vmatprep.subr.bf16.mxu0 0
          %1703 = vmatpush1.bf16.msra.mxu0 0
          %1704 = vmatprep.subr.bf16.mxu0 0
          %1705 = vmatpush1.bf16.msra.mxu0 0
          %1706 = vmatprep.mubr.bf16.mxu0 0
          %1707 = vmatmul.mubr.bf16.gmra.mrb[0].mxu0 %v1669
          %v1708 = vpop.f32.mrb[0].mxu0
          %v1709 = vadd.f32 %v1642, %v1708
          %v1710 = vpop.f32.mrb[0].mxu0
          %v1711 = vpop.f32.mrb[0].mxu0
          %v1712 = vadd.f32 %v1645, %v1711
          %v1713 = vpop.f32.mrb[0].mxu0
          %1714 = vmatprep.mubr.bf16.mxu0 0
          %1715 = vmatmul.mubr.bf16.gmra.mrb[0].mxu0 %v1672
          %v1716 = vpop.f32.mrb[0].mxu0
          %v1717 = vadd.f32 %v1650, %v1716
          %v1718 = vpop.f32.mrb[0].mxu0
          %v1719 = vpop.f32.mrb[0].mxu0
          %v1720 = vadd.f32 %v1653, %v1719
          %v1721 = vpop.f32.mrb[0].mxu0
          %1722 = vdwg.mxu0
          %v1723 = vld [vmem:[%s1003] sm:$0x1]
          %v1725 = vlaneseq
          %v1726 = vshrl.u32 %v1725, 7
          %v1727 = vsub.s32 0, %v1726
          %v1728 = vrot.slane %v1723, %v1727
          %v1730 = vadd.f32 %v1709, %v1728
          %v1731 = vadd.f32 %v1712, %v1728
          %v1732 = vadd.f32 %v1717, %v1728
          %v1733 = vadd.f32 %v1720, %v1728
          %v1734 = vmax.f32 %v1730, 0.0
          %v1735 = vmax.f32 %v1731, 0.0
          %v1736 = vmax.f32 %v1732, 0.0
          %v1737 = vmax.f32 %v1733, 0.0
          %v1738 = vld [vmem:[%s995] sm:$0xf]
          %v1739 = vld [vmem:[%s995 + $0x4] sm:$0xf]
          %v1740 = vld [vmem:[%s995 + $0x8] sm:$0xf]
          %v1741 = vld [vmem:[%s995 + $0xc] sm:$0xf]
          %v1742 = vpack.c.bf16 %v1735, %v1734
          %v1743 = vpack.c.bf16 %v1737, %v1736
          %v1744 = vld [vmem:[%s1011] sm:$0x1]
          %v1746 = vlaneseq
          %v1747 = vshrl.u32 %v1746, 7
          %v1748 = vsub.s32 0, %v1747
          %v1749 = vrot.slane %v1744, %v1748
          %v1755 = vunpack.c.l.b16 %v1738
          %v1756 = vunpack.c.l.b16 %v1739
          %v1757 = vunpack.c.l.b16 %v1740
          %v1758 = vunpack.c.l.b16 %v1741
          %v1759 = vpack.c.b16 %v1756, %v1755
          %v1760 = vpack.c.b16 %v1758, %v1757
          %v1764 = vsel %vm1521, %v1742, 0
          %v1767 = vsel %vm1521, %v1743, 0
          %1769 = vmatprep.subr.bf16.mxu0 0
          %1770 = vmatpush1.bf16.msra.mxu0 %v1759
          %1771 = vmatprep.subr.bf16.mxu0 0
          %1772 = vmatpush1.bf16.msra.mxu0 %v1760
          %1773 = vmatprep.subr.bf16.mxu0 0
          %1774 = vmatpush1.bf16.msra.mxu0 0
          %1775 = vmatprep.subr.bf16.mxu0 0
          %1776 = vmatpush1.bf16.msra.mxu0 0
          %1777 = vmatprep.subr.bf16.mxu0 0
          %1778 = vmatpush1.bf16.msra.mxu0 0
          %1779 = vmatprep.subr.bf16.mxu0 0
          %1780 = vmatpush1.bf16.msra.mxu0 0
          %1781 = vmatprep.subr.bf16.mxu0 0
          %1782 = vmatpush1.bf16.msra.mxu0 0
          %1783 = vmatprep.subr.bf16.mxu0 0
          %1784 = vmatpush1.bf16.msra.mxu0 0
          %1785 = vmatprep.subr.bf16.mxu0 0
          %1786 = vmatpush1.bf16.msra.mxu0 0
          %1787 = vmatprep.subr.bf16.mxu0 0
          %1788 = vmatpush1.bf16.msra.mxu0 0
          %1789 = vmatprep.subr.bf16.mxu0 0
          %1790 = vmatpush1.bf16.msra.mxu0 0
          %1791 = vmatprep.subr.bf16.mxu0 0
          %1792 = vmatpush1.bf16.msra.mxu0 0
          %1793 = vmatprep.subr.bf16.mxu0 0
          %1794 = vmatpush1.bf16.msra.mxu0 0
          %1795 = vmatprep.subr.bf16.mxu0 0
          %1796 = vmatpush1.bf16.msra.mxu0 0
          %1797 = vmatprep.subr.bf16.mxu0 0
          %1798 = vmatpush1.bf16.msra.mxu0 0
          %1799 = vmatprep.subr.bf16.mxu0 0
          %1800 = vmatpush1.bf16.msra.mxu0 0
          %1801 = vmatprep.mubr.bf16.mxu0 0
          %1802 = vmatmul.mubr.bf16.gmra.mrb[0].mxu0 %v1764
          %v1803 = vpop.f32.mrb[0].mxu0
          %v1804 = vadd.f32 %v1749, %v1803
          %v1805 = vpop.f32.mrb[0].mxu0
          %v1806 = vpop.f32.mrb[0].mxu0
          %v1807 = vadd.f32 %v1749, %v1806
          %v1808 = vpop.f32.mrb[0].mxu0
          %1809 = vmatprep.mubr.bf16.mxu0 0
          %1810 = vmatmul.mubr.bf16.gmra.mrb[0].mxu0 %v1767
          %v1811 = vpop.f32.mrb[0].mxu0
          %v1812 = vadd.f32 %v1749, %v1811
          %v1813 = vpop.f32.mrb[0].mxu0
          %v1814 = vpop.f32.mrb[0].mxu0
          %v1815 = vadd.f32 %v1749, %v1814
          %v1816 = vpop.f32.mrb[0].mxu0
          %1817 = vdwg.mxu0
          %v1818 = vld [vmem:[%s1019] sm:$0x1]
          %v1819 = vld [vmem:[%s1027] sm:$0x1]
          %v1820 = vsel %vm1521, %v1804, 0.0
          %1821 = vadd.xlane.f32.xlu0 %v1820
          %v1822 = vpop.xlane.xlu0 %1821
          %v1823 = vsel %vm1521, %v1807, 0.0
          %1824 = vadd.xlane.f32.xlu0 %v1823
          %v1825 = vpop.xlane.xlu0 %1824
          %v1826 = vsel %vm1521, %v1812, 0.0
          %1827 = vadd.xlane.f32.xlu0 %v1826
          %v1828 = vpop.xlane.xlu0 %1827
          %v1829 = vsel %vm1521, %v1815, 0.0
          %1830 = vadd.xlane.f32.xlu0 %v1829
          %v1831 = vpop.xlane.xlu0 %1830
          %v1832 = vrcp.pop 32.0
          %v1833 = vmul.f32 %v1822, %v1832
          %v1834 = vmul.f32 %v1825, %v1832
          %v1835 = vmul.f32 %v1828, %v1832
          %v1836 = vmul.f32 %v1831, %v1832
          %v1837 = vmul.f32 %v1804, %v1804
          %v1838 = vmul.f32 %v1807, %v1807
          %v1839 = vmul.f32 %v1812, %v1812
          %v1840 = vmul.f32 %v1815, %v1815
          %v1841 = vsel %vm1521, %v1837, 0.0
          %1842 = vadd.xlane.f32.xlu0 %v1841
          %v1843 = vpop.xlane.xlu0 %1842
          %v1844 = vsel %vm1521, %v1838, 0.0
          %1845 = vadd.xlane.f32.xlu0 %v1844
          %v1846 = vpop.xlane.xlu0 %1845
          %v1847 = vsel %vm1521, %v1839, 0.0
          %1848 = vadd.xlane.f32.xlu0 %v1847
          %v1849 = vpop.xlane.xlu0 %1848
          %v1850 = vsel %vm1521, %v1840, 0.0
          %1851 = vadd.xlane.f32.xlu0 %v1850
          %v1852 = vpop.xlane.xlu0 %1851
          %v1853 = vmul.f32 %v1843, %v1832
          %v1854 = vmul.f32 %v1846, %v1832
          %v1855 = vmul.f32 %v1849, %v1832
          %v1856 = vmul.f32 %v1852, %v1832
          %v1857 = vmul.f32 %v1833, %v1833
          %v1858 = vmul.f32 %v1834, %v1834
          %v1859 = vmul.f32 %v1835, %v1835
          %v1860 = vmul.f32 %v1836, %v1836
          %v1861 = vsub.f32 %v1853, %v1857
          %v1862 = vsub.f32 %v1854, %v1858
          %v1863 = vsub.f32 %v1855, %v1859
          %v1864 = vsub.f32 %v1856, %v1860
          %v1865 = vmax.f32 %v1861, 0.0
          %v1866 = vmax.f32 %v1862, 0.0
          %v1867 = vmax.f32 %v1863, 0.0
          %v1868 = vmax.f32 %v1864, 0.0
          %v1869 = vsub.f32 %v1804, %v1833
          %v1870 = vsub.f32 %v1807, %v1834
          %v1871 = vsub.f32 %v1812, %v1835
          %v1872 = vsub.f32 %v1815, %v1836
          %v1873 = vadd.f32 %v1865, 1e-05
          %v1874 = vadd.f32 %v1866, 1e-05
          %v1875 = vadd.f32 %v1867, 1e-05
          %v1876 = vadd.f32 %v1868, 1e-05
          %v1877 = vrsqrt.pop %v1873
          %v1878 = vrsqrt.pop %v1874
          %v1879 = vrsqrt.pop %v1875
          %v1880 = vrsqrt.pop %v1876
          %v1881 = vmul.f32 %v1869, %v1877
          %v1882 = vmul.f32 %v1870, %v1878
          %v1883 = vmul.f32 %v1871, %v1879
          %v1884 = vmul.f32 %v1872, %v1880
          %v1886 = vlaneseq
          %v1887 = vshrl.u32 %v1886, 7
          %v1888 = vsub.s32 0, %v1887
          %v1889 = vrot.slane %v1818, %v1888
          %v1891 = vmul.f32 %v1881, %v1889
          %v1892 = vmul.f32 %v1882, %v1889
          %v1893 = vmul.f32 %v1883, %v1889
          %v1894 = vmul.f32 %v1884, %v1889
          %v1896 = vlaneseq
          %v1897 = vshrl.u32 %v1896, 7
          %v1898 = vsub.s32 0, %v1897
          %v1899 = vrot.slane %v1819, %v1898
          %v1901 = vadd.f32 %v1891, %v1899
          %v1902 = vadd.f32 %v1892, %v1899
          %v1903 = vadd.f32 %v1893, %v1899
          %v1904 = vadd.f32 %v1894, %v1899
          %v1905 = vadd.f32 %v1499, %v1901
          %v1906 = vadd.f32 %v1500, %v1902
          %v1907 = vadd.f32 %v1501, %v1903
          %v1908 = vadd.f32 %v1502, %v1904
          %s1909 = sadd.s32 %s1490, %s1171
          %s1910 = scalar_lea.vmem [#allocation2], %s1909
          %1911 = vst.msk [vmem:[%s1910] sm:$0xff] %vm1521, %v1905
          %1912 = vst.msk [vmem:[%s1910 + $0x8] sm:$0xff] %vm1521, %v1906
          %1913 = vst.msk [vmem:[%s1910 + $0x10] sm:$0xff] %vm1521, %v1907
          %1914 = vst.msk [vmem:[%s1910 + $0x18] sm:$0xff] %vm1521, %v1908
          %v1915 = vpack.c.bf16 %v1906, %v1905
          %v1916 = vpack.c.bf16 %v1908, %v1907
          %s1917 = sshra.s32 %s1909, 4
          %s1918 = sand.u32 %s1909, 15
          %s1919 = smul.addr %s1917, 8
          %s1920 = scalar_lea.vmem [#allocation3], %s1919
          %1921 = vst.msk [vmem:[%s1920] sm:$0xff] %vm1521, %v1915
          %1922 = vst.msk [vmem:[%s1920 + $0x8] sm:$0xff] %vm1521, %v1916
        $region180: #{tpu_custom_call.1} parent=95 // pred_fallthru
          _
        %p1923 = scmp.eq.s32.totalorder %s44, 3
        // Predicated region
        $region181: #{tpu_custom_call.1} parent=95 // pred_check
          %p1924 = pneg %p1923
        $region182: #{tpu_custom_call.1} parent=95 // pred_check_branch
          %1926 = sbr.rel (%p1924) target = $region184
        $region183: #{tpu_custom_call.1} parent=95 // pred_region
          %s1927 = scalar_lea.vmem [#allocation2], %s1171
          %v1928 = vld [vmem:[%s1927] sm:$0xff]
          %v1929 = vld [vmem:[%s1927 + $0x8] sm:$0xff]
          %v1930 = vld [vmem:[%s1927 + $0x10] sm:$0xff]
          %v1931 = vld [vmem:[%s1927 + $0x18] sm:$0xff]
          %v1932 = vld [vmem:[#allocation25] sm:$0xf]
          %v1933 = vld [vmem:[#allocation25 + $0x4] sm:$0xf]
          %v1934 = vld [vmem:[#allocation25 + $0x8] sm:$0xf]
          %v1935 = vld [vmem:[#allocation25 + $0xc] sm:$0xf]
          %v1936 = vpack.c.bf16 %v1929, %v1928
          %v1937 = vpack.c.bf16 %v1931, %v1930
          %v1938 = vld [vmem:[#allocation26] sm:$0x1]
          %v1940 = vlaneseq
          %v1941 = vshrl.u32 %v1940, 7
          %v1942 = vsub.s32 0, %v1941
          %v1943 = vrot.slane %v1938, %v1942
          %v1949 = vunpack.c.l.b16 %v1932
          %v1950 = vunpack.c.l.b16 %v1933
          %v1951 = vunpack.c.l.b16 %v1934
          %v1952 = vunpack.c.l.b16 %v1935
          %v1953 = vpack.c.b16 %v1950, %v1949
          %v1954 = vpack.c.b16 %v1952, %v1951
          %vm1957 = vcmask 261120
          %v1959 = vsel %vm1957, %v1936, 0
          %v1962 = vsel %vm1957, %v1937, 0
          %1964 = vmatprep.subr.bf16.mxu0 0
          %1965 = vmatpush1.bf16.msra.mxu0 %v1953
          %1966 = vmatprep.subr.bf16.mxu0 0
          %1967 = vmatpush1.bf16.msra.mxu0 %v1954
          %1968 = vmatprep.subr.bf16.mxu0 0
          %1969 = vmatpush1.bf16.msra.mxu0 0
          %1970 = vmatprep.subr.bf16.mxu0 0
          %1971 = vmatpush1.bf16.msra.mxu0 0
          %1972 = vmatprep.subr.bf16.mxu0 0
          %1973 = vmatpush1.bf16.msra.mxu0 0
          %1974 = vmatprep.subr.bf16.mxu0 0
          %1975 = vmatpush1.bf16.msra.mxu0 0
          %1976 = vmatprep.subr.bf16.mxu0 0
          %1977 = vmatpush1.bf16.msra.mxu0 0
          %1978 = vmatprep.subr.bf16.mxu0 0
          %1979 = vmatpush1.bf16.msra.mxu0 0
          %1980 = vmatprep.subr.bf16.mxu0 0
          %1981 = vmatpush1.bf16.msra.mxu0 0
          %1982 = vmatprep.subr.bf16.mxu0 0
          %1983 = vmatpush1.bf16.msra.mxu0 0
          %1984 = vmatprep.subr.bf16.mxu0 0
          %1985 = vmatpush1.bf16.msra.mxu0 0
          %1986 = vmatprep.subr.bf16.mxu0 0
          %1987 = vmatpush1.bf16.msra.mxu0 0
          %1988 = vmatprep.subr.bf16.mxu0 0
          %1989 = vmatpush1.bf16.msra.mxu0 0
          %1990 = vmatprep.subr.bf16.mxu0 0
          %1991 = vmatpush1.bf16.msra.mxu0 0
          %1992 = vmatprep.subr.bf16.mxu0 0
          %1993 = vmatpush1.bf16.msra.mxu0 0
          %1994 = vmatprep.subr.bf16.mxu0 0
          %1995 = vmatpush1.bf16.msra.mxu0 0
          %1996 = vmatprep.mubr.bf16.mxu0 0
          %1997 = vmatmul.mubr.bf16.gmra.mrb[0].mxu0 %v1959
          %v1998 = vpop.f32.mrb[0].mxu0
          %v1999 = vadd.f32 %v1943, %v1998
          %v2000 = vpop.f32.mrb[0].mxu0
          %v2001 = vpop.f32.mrb[0].mxu0
          %v2002 = vadd.f32 %v1943, %v2001
          %v2003 = vpop.f32.mrb[0].mxu0
          %2004 = vmatprep.mubr.bf16.mxu0 0
          %2005 = vmatmul.mubr.bf16.gmra.mrb[0].mxu0 %v1962
          %v2006 = vpop.f32.mrb[0].mxu0
          %v2007 = vadd.f32 %v1943, %v2006
          %v2008 = vpop.f32.mrb[0].mxu0
          %v2009 = vpop.f32.mrb[0].mxu0
          %v2010 = vadd.f32 %v1943, %v2009
          %v2011 = vpop.f32.mrb[0].mxu0
          %2012 = vdwg.mxu0
          %v2013 = vmax.f32 %v1999, 0.0
          %v2014 = vmax.f32 %v2002, 0.0
          %v2015 = vmax.f32 %v2007, 0.0
          %v2016 = vmax.f32 %v2010, 0.0
          %v2017 = vld [vmem:[#allocation27] sm:$0xf]
          %v2018 = vld [vmem:[#allocation27 + $0x4] sm:$0xf]
          %v2019 = vld [vmem:[#allocation27 + $0x8] sm:$0xf]
          %v2020 = vld [vmem:[#allocation27 + $0xc] sm:$0xf]
          %v2021 = vpack.c.bf16 %v2014, %v2013
          %v2022 = vpack.c.bf16 %v2016, %v2015
          %v2023 = vld [vmem:[#allocation28] sm:$0x1]
          %v2025 = vlaneseq
          %v2026 = vshrl.u32 %v2025, 7
          %v2027 = vsub.s32 0, %v2026
          %v2028 = vrot.slane %v2023, %v2027
          %v2034 = vunpack.c.l.b16 %v2017
          %v2035 = vunpack.c.l.b16 %v2018
          %v2036 = vunpack.c.l.b16 %v2019
          %v2037 = vunpack.c.l.b16 %v2020
          %v2038 = vpack.c.b16 %v2035, %v2034
          %v2039 = vpack.c.b16 %v2037, %v2036
          %v2043 = vsel %vm1957, %v2021, 0
          %v2046 = vsel %vm1957, %v2022, 0
          %2048 = vmatprep.subr.bf16.mxu0 0
          %2049 = vmatpush1.bf16.msra.mxu0 %v2038
          %2050 = vmatprep.subr.bf16.mxu0 0
          %2051 = vmatpush1.bf16.msra.mxu0 %v2039
          %2052 = vmatprep.subr.bf16.mxu0 0
          %2053 = vmatpush1.bf16.msra.mxu0 0
          %2054 = vmatprep.subr.bf16.mxu0 0
          %2055 = vmatpush1.bf16.msra.mxu0 0
          %2056 = vmatprep.subr.bf16.mxu0 0
          %2057 = vmatpush1.bf16.msra.mxu0 0
          %2058 = vmatprep.subr.bf16.mxu0 0
          %2059 = vmatpush1.bf16.msra.mxu0 0
          %2060 = vmatprep.subr.bf16.mxu0 0
          %2061 = vmatpush1.bf16.msra.mxu0 0
          %2062 = vmatprep.subr.bf16.mxu0 0
          %2063 = vmatpush1.bf16.msra.mxu0 0
          %2064 = vmatprep.subr.bf16.mxu0 0
          %2065 = vmatpush1.bf16.msra.mxu0 0
          %2066 = vmatprep.subr.bf16.mxu0 0
          %2067 = vmatpush1.bf16.msra.mxu0 0
          %2068 = vmatprep.subr.bf16.mxu0 0
          %2069 = vmatpush1.bf16.msra.mxu0 0
          %2070 = vmatprep.subr.bf16.mxu0 0
          %2071 = vmatpush1.bf16.msra.mxu0 0
          %2072 = vmatprep.subr.bf16.mxu0 0
          %2073 = vmatpush1.bf16.msra.mxu0 0
          %2074 = vmatprep.subr.bf16.mxu0 0
          %2075 = vmatpush1.bf16.msra.mxu0 0
          %2076 = vmatprep.subr.bf16.mxu0 0
          %2077 = vmatpush1.bf16.msra.mxu0 0
          %2078 = vmatprep.subr.bf16.mxu0 0
          %2079 = vmatpush1.bf16.msra.mxu0 0
          %2080 = vmatprep.mubr.bf16.mxu0 0
          %2081 = vmatmul.mubr.bf16.gmra.mrb[0].mxu0 %v2043
          %v2082 = vpop.f32.mrb[0].mxu0
          %v2083 = vadd.f32 %v2028, %v2082
          %v2084 = vpop.f32.mrb[0].mxu0
          %v2085 = vpop.f32.mrb[0].mxu0
          %v2086 = vadd.f32 %v2028, %v2085
          %v2087 = vpop.f32.mrb[0].mxu0
          %2088 = vmatprep.mubr.bf16.mxu0 0
          %2089 = vmatmul.mubr.bf16.gmra.mrb[0].mxu0 %v2046
          %v2090 = vpop.f32.mrb[0].mxu0
          %v2091 = vadd.f32 %v2028, %v2090
          %v2092 = vpop.f32.mrb[0].mxu0
          %v2093 = vpop.f32.mrb[0].mxu0
          %v2094 = vadd.f32 %v2028, %v2093
          %v2095 = vpop.f32.mrb[0].mxu0
          %2096 = vdwg.mxu0
          %2097 = vst [vmem:[%s1128] sm:$0xff] %v2083
          %2098 = vst [vmem:[%s1128 + $0x8] sm:$0xff] %v2086
          %2099 = vst [vmem:[%s1128 + $0x10] sm:$0xff] %v2091
          %2100 = vst [vmem:[%s1128 + $0x18] sm:$0xff] %v2094
        $region184: #{tpu_custom_call.1} parent=95 // pred_fallthru
          _
        %s2101 = sand.u32 %s577, 1
        %s2102 = scalar_lea.sflag [#allocation6], %s2101
        %s2103 = sand.u32 %s577, 1
        %s2104 = smul.addr %s2103, 32
        %s2105 = scalar_lea.vmem [#allocation29], %s2104
        // Predicated region
        $region185: #{tpu_custom_call.1} parent=95 // pred_check
          %p2106 = pneg %p587
        $region186: #{tpu_custom_call.1} parent=95 // pred_check_branch
          %2108 = sbr.rel (%p2106) target = $region188
        $region187: #{tpu_custom_call.1} parent=95 // pred_region
          %p2109 = scmp.eq.s32.totalorder %s44, 3
          %s2110 = scalar_select %p2109, %s45, 0
          %s2111 = smul.u32 4, %s2110
          %s2113 = ssub.s32 512, 512
          %2114 = vsyncadd %s2102, %s2113
          %s2115 = smul.addr %s2111, 128
          %s2116 = scalar_lea.hbm %s19, %s2115
          %s2117 = sshll.u32 %s2105, 4
          %s2118 = int_to_ptr.vmem [resolvable:$true] %s2117
          %2123 = dma.vmem_to_hbm [thread:$0]  %s2118, 512, %s2116, %s2102, 128, 128, 8
        $region188: #{tpu_custom_call.1} parent=95 // pred_fallthru
          _
      $region96: #{tpu_custom_call.1} parent=5 // pred_fallthru
        _
      %p2124 = scmp.le.s32.totalorder 2, %s35
      // Predicated region
      $region189: #{tpu_custom_call.1} parent=5 // pred_check
        %p2125 = pneg %p2124
      $region190: #{tpu_custom_call.1} parent=5 // pred_check_branch
        %2127 = sbr.rel (%p2125) target = $region192
      $region191: #{tpu_custom_call.1} parent=5 // pred_region
        %s2128 = ssub.s32 %s35, 2
        // Predicated region
        $region193: #{tpu_custom_call.1} parent=191 // pred_check
          %p2129 = pneg %p593
        $region194: #{tpu_custom_call.1} parent=191 // pred_check_branch
          %2131 = sbr.rel (%p2129) target = $region196
        $region195: #{tpu_custom_call.1} parent=191 // pred_region
          %s2132 = sand.u32 %s578, 1
          %s2133 = scalar_lea.sflag [#allocation6], %s2132
          %s2134 = sand.u32 %s578, 1
          %s2135 = smul.addr %s2134, 32
          %s2136 = scalar_lea.vmem [#allocation29], %s2135
          %2137 = dma.done %s2133, 512
        $region196: #{tpu_custom_call.1} parent=191 // pred_fallthru
          _
      $region192: #{tpu_custom_call.1} parent=5 // pred_fallthru
        _
    $region6: #{tpu_custom_call.1} parent=1 // loop_footer
      %s39 = sadd.s32 1, %s35
    $region7: #{tpu_custom_call.1} parent=1 // loop_footer_branch
      %34 = sbr.rel target = $region3
    $region8: #{tpu_custom_call.1} parent=1 // loop_exit
      _
    %2138 = vsyncpa [#allocation5], 1
    %s2139 = scalar_lea.sflag [#allocation5], 1
    %2140 = vsyncpa %s2139, 1
    %2141 = vsyncpa [#allocation8], 1
    %2142 = vsyncpa [#allocation11], 1
    %2143 = vsyncpa [#allocation14], 1
    %2144 = vsyncpa [#allocation17], 1
    %2145 = vsyncpa [#allocation6], 1
    %s2146 = scalar_lea.sflag [#allocation6], 1
    %2147 = vsyncpa %s2146, 1

</llo_original>
